<compile_context>
chip_gen: v7x
topology: tpu7x:2x2x1
jax: 0.10.0
libtpu: 0.0.40
codegen_flags: <defaults>
</compile_context>

<pallas_src>
import functools

import jax
import jax.numpy as jnp
import numpy as np
from jax import lax
from jax.experimental import pallas as pl
from jax.experimental.pallas import tpu as pltpu


# ----------------------------------------------------------------------------
# Fused kernel: both TreeLSTM directions + entity/root selection.
# ----------------------------------------------------------------------------
def _dep_layer_kernel(num_levels, h_size,
                      idx_ref,                       # SMEM (4,) int32: e1, e2, root, pad
                      x_ref, adj_ref, lvl_ref,
                      w_ref, u_ref, b_ref,
                      out_ref,
                      hc_vmem):
    H = h_size
    N = x_ref.shape[0]

    # ---- loop-invariant loads / projections (hoisted out of the level loop) ----
    x = x_ref[...]                                   # (N, D) f32
    adj_up = adj_ref[0].astype(jnp.float32)          # (N, N); bf16 in HBM, exact 0/1
    adj_dn = adj_ref[1].astype(jnp.float32)
    lvl_up = lvl_ref[:, 0:1]                         # (N, 1) int32, leaves-first
    lvl_dn = lvl_ref[:, 1:2]                         # (N, 1) int32, root-first
    u_blk = u_ref[...]                               # (4H, 8H) block-diag recurrent weights
    # One fused input projection for BOTH directions: (N, 8H) = 256 lanes.
    xw = jnp.dot(x, w_ref[...], preferred_element_type=jnp.float32) + b_ref[...]

    def level_step(level, hc):
        # hc lanes: [h_up | c_up | h_dn | c_dn], shape (N, 4H), loop-carried value.
        sum_up = jnp.dot(adj_up, hc[:, 0:2 * H], preferred_element_type=jnp.float32)
        sum_dn = jnp.dot(adj_dn, hc[:, 2 * H:4 * H], preferred_element_type=jnp.float32)
        hc_sum = jnp.concatenate([sum_up, sum_dn], axis=-1)            # (N, 4H)
        # ONE fused gate matmul for both directions (block-diag U; c rows are zero).
        # Gate columns: [i_up | o_up | f_up | i_dn | o_dn | f_dn | u_up | u_dn].
        gates = xw + jnp.dot(hc_sum, u_blk, preferred_element_type=jnp.float32)
        sig = jax.nn.sigmoid(gates[:, 0:6 * H])       # one EUP push, 6H lanes
        uu = jnp.tanh(gates[:, 6 * H:8 * H])          # one EUP push, 2H lanes
        c_new_up = sig[:, 0:H] * uu[:, 0:H] \
            + sig[:, 2 * H:3 * H] * hc_sum[:, H:2 * H]
        c_new_dn = sig[:, 3 * H:4 * H] * uu[:, H:2 * H] \
            + sig[:, 5 * H:6 * H] * hc_sum[:, 3 * H:4 * H]
        tc = jnp.tanh(jnp.concatenate([c_new_up, c_new_dn], axis=-1))  # one EUP push
        h_new_up = sig[:, H:2 * H] * tc[:, 0:H]
        h_new_dn = sig[:, 4 * H:5 * H] * tc[:, H:2 * H]
        hc_up = jnp.where(lvl_up == level,
                          jnp.concatenate([h_new_up, c_new_up], axis=-1),
                          hc[:, 0:2 * H])
        hc_dn = jnp.where(lvl_dn == level,
                          jnp.concatenate([h_new_dn, c_new_dn], axis=-1),
                          hc[:, 2 * H:4 * H])
        return jnp.concatenate([hc_up, hc_dn], axis=-1)

    hc0 = jnp.zeros((N, 4 * H), jnp.float32)
    # Static short trip count -> fully unroll for LLO scheduling visibility.
    hc_fin = lax.fori_loop(0, num_levels, level_step, hc0, unroll=True)

    # Stage the final state ONCE in VMEM, then gather rows by prefetched index
    # (replaces 3 masked cross-sublane reductions).
    hc_vmem[...] = hc_fin
    row1 = hc_vmem[pl.ds(idx_ref[0], 1), :]           # e1  row, (1, 4H)
    row2 = hc_vmem[pl.ds(idx_ref[1], 1), :]           # e2  row
    rowA = hc_vmem[pl.ds(idx_ref[2], 1), :]           # root row
    h1 = row1[:, 0:H]                                 # hp[e1, 0, :]  (bottom-up)
    h2 = row2[:, 0:H]                                 # hp[e2, 0, :]
    hA = rowA[:, 2 * H:3 * H]                         # hp[root, 1, :] (top-down)
    pad = jnp.zeros((1, H), jnp.float32)
    # Rows: 0 = hp_d12 = cat(hpA, hp1, hp2), 1 = hp_d21 = cat(hpA, hp2, hp1);
    # padded to 4H = 128 lanes so the single store is unmasked / lane-dense.
    d12 = jnp.concatenate([hA, h1, h2, pad], axis=-1)
    d21 = jnp.concatenate([hA, h2, h1, pad], axis=-1)
    out_ref[...] = jnp.concatenate([d12, d21], axis=0)


# ----------------------------------------------------------------------------
# Weight fusion helpers (wrapper side).
# ----------------------------------------------------------------------------
def _fuse_cols(m_iou_up, m_f_up, m_iou_dn, m_f_dn, H):
    # Columns: [i_up | o_up | f_up | i_dn | o_dn | f_dn | u_up | u_dn] -> (rows, 8H)
    return jnp.concatenate([
        m_iou_up[:, 0:H], m_iou_up[:, H:2 * H], m_f_up,
        m_iou_dn[:, 0:H], m_iou_dn[:, H:2 * H], m_f_dn,
        m_iou_up[:, 2 * H:3 * H], m_iou_dn[:, 2 * H:3 * H]], axis=1)


def _build_u_blk(params_up, params_down, H):
    # Rows follow the aggregated-state lane layout [h_up | c_up | h_dn | c_dn];
    # c rows are zero (they do not feed the gates).  Shape (4H, 8H).
    zH = jnp.zeros((H, H), jnp.float32)
    up = jnp.concatenate([params_up["u_iou"][:, 0:H], params_up["u_iou"][:, H:2 * H],
                          params_up["u_f"], zH, zH, zH,
                          params_up["u_iou"][:, 2 * H:3 * H], zH], axis=1)
    dn = jnp.concatenate([zH, zH, zH,
                          params_down["u_iou"][:, 0:H], params_down["u_iou"][:, H:2 * H],
                          params_down["u_f"], zH,
                          params_down["u_iou"][:, 2 * H:3 * H]], axis=1)
    zrow = jnp.zeros((H, 8 * H), jnp.float32)
    return jnp.concatenate([up, zrow, dn, zrow], axis=0)


# ----------------------------------------------------------------------------
# DepLayer forward (single pallas_call wrapper).
# ----------------------------------------------------------------------------
def dep_layer_forward(x, adj_child, adj_parent, lvl_bu, lvl_td,
                      e1_idx, e2_idx, root_idx,
                      params_up, params_down, num_levels):
    N, D = x.shape
    H = params_up["u_f"].shape[0]

    w_all = _fuse_cols(params_up["w_iou"], params_up["w_f"],
                       params_down["w_iou"], params_down["w_f"], H)    # (D, 8H)
    b_all = _fuse_cols(params_up["b_iou"], params_up["b_f"],
                       params_down["b_iou"], params_down["b_f"], H)    # (1, 8H)
    u_blk = _build_u_blk(params_up, params_down, H)                    # (4H, 8H)

    adj = jnp.stack([adj_child, adj_parent], axis=0).astype(jnp.bfloat16)  # exact 0/1
    lvl = jnp.concatenate([lvl_bu, lvl_td], axis=1).astype(jnp.int32)      # (N, 2)
    sel_idx = jnp.array([e1_idx, e2_idx, root_idx, 0], jnp.int32)          # SMEM prefetch

    kernel = functools.partial(_dep_layer_kernel, num_levels, H)
    out = pl.pallas_call(
        kernel,
        out_shape=jax.ShapeDtypeStruct((2, 4 * H), jnp.float32),
        grid_spec=pltpu.PrefetchScalarGridSpec(
            num_scalar_prefetch=1,
            grid=(1,),
            in_specs=[
                pl.BlockSpec((N, D), lambda i, idx: (0, 0)),             # x
                pl.BlockSpec((2, N, N), lambda i, idx: (0, 0, 0)),       # adjacency (bf16)
                pl.BlockSpec((N, 2), lambda i, idx: (0, 0)),             # level ids
                pl.BlockSpec((D, 8 * H), lambda i, idx: (0, 0)),         # fused W
                pl.BlockSpec((4 * H, 8 * H), lambda i, idx: (0, 0)),     # block-diag U
                pl.BlockSpec((1, 8 * H), lambda i, idx: (0, 0)),         # fused b
            ],
            out_specs=pl.BlockSpec((2, 4 * H), lambda i, idx: (0, 0)),
            scratch_shapes=[pltpu.VMEM((N, 4 * H), jnp.float32)],        # selection staging
        ),
        compiler_params=pltpu.CompilerParams(dimension_semantics=("arbitrary",)),
    )(sel_idx, x, adj, lvl, w_all, u_blk, b_all)

    # Match torch .squeeze(): one match per mask -> 1-D vectors of size 3*h_size.
    return out[0, :3 * H], out[1, :3 * H]


# ----------------------------------------------------------------------------
# Pure-JAX reference of the same math (correctness check).
# ----------------------------------------------------------------------------
def _treelstm_ref(x, adj, lvl, params, num_levels):
    N = x.shape[0]
    H = params["u_f"].shape[0]
    h = jnp.zeros((N, H), jnp.float32)
    c = jnp.zeros((N, H), jnp.float32)
    xw_iou = x @ params["w_iou"] + params["b_iou"]
    xw_f = x @ params["w_f"] + params["b_f"]
    for l in range(num_levels):
        h_sum = adj @ h
        c_sum = adj @ c
        iou = xw_iou + h_sum @ params["u_iou"]
        i_g = jax.nn.sigmoid(iou[:, :H])
        o_g = jax.nn.sigmoid(iou[:, H:2 * H])
        u_g = jnp.tanh(iou[:, 2 * H:])
        f_g = jax.nn.sigmoid(xw_f + h_sum @ params["u_f"])
        c_new = i_g * u_g + f_g * c_sum
        h_new = o_g * jnp.tanh(c_new)
        mask = (lvl == l)
        h = jnp.where(mask, h_new, h)
        c = jnp.where(mask, c_new, c)
    return h


def _init_params(key, D, H):
    ks = jax.random.split(key, 6)
    s = 0.1
    return {
        "w_iou": s * jax.random.normal(ks[0], (D, 3 * H), jnp.float32),
        "u_iou": s * jax.random.normal(ks[1], (H, 3 * H), jnp.float32),
        "b_iou": s * jax.random.normal(ks[2], (1, 3 * H), jnp.float32),
        "w_f": s * jax.random.normal(ks[3], (D, H), jnp.float32),
        "u_f": s * jax.random.normal(ks[4], (H, H), jnp.float32),
        "b_f": s * jax.random.normal(ks[5], (1, H), jnp.float32),
    }


if __name__ == "__main__":
    N = 8           # number of nodes in the dependency tree
    D = 32          # input_size
    H = 32          # h_size
    key = jax.random.PRNGKey(0)
    k_x, k_up, k_down = jax.random.split(key, 3)

    # Small dependency tree: node 0 is the root.
    parent = np.array([-1, 0, 0, 1, 1, 2, 2, 5], dtype=np.int32)
    depth = np.zeros(N, dtype=np.int32)
    for n in range(1, N):
        depth[n] = depth[parent[n]] + 1
    max_depth = int(depth.max())
    num_levels = max_depth + 1

    adj_child = np.zeros((N, N), dtype=np.float32)   # adj_child[j,k]=1 iff k is child of j
    adj_parent = np.zeros((N, N), dtype=np.float32)  # adj_parent[j,k]=1 iff k is parent of j
    for n in range(1, N):
        adj_child[parent[n], n] = 1.0
        adj_parent[n, parent[n]] = 1.0

    lvl_bu = (max_depth - depth).astype(np.int32).reshape(N, 1)  # leaves first
    lvl_td = depth.astype(np.int32).reshape(N, 1)                # root first

    # g.ndata['e1'], g.ndata['e2'], g.ndata['root'] -> single node indices.
    e1_idx, e2_idx, root_idx = 3, 6, 0

    x = jax.random.normal(k_x, (N, D), jnp.float32)
    params_up = _init_params(k_up, D, H)
    params_down = _init_params(k_down, D, H)

    d12, d21 = dep_layer_forward(
        x, jnp.asarray(adj_child), jnp.asarray(adj_parent),
        jnp.asarray(lvl_bu), jnp.asarray(lvl_td),
        e1_idx, e2_idx, root_idx,
        params_up, params_down, num_levels)
    jax.block_until_ready((d12, d21))

    # Reference check.
    h_bu_ref = _treelstm_ref(x, jnp.asarray(adj_child), jnp.asarray(lvl_bu),
                             params_up, num_levels)
    h_td_ref = _treelstm_ref(x, jnp.asarray(adj_parent), jnp.asarray(lvl_td),
                             params_down, num_levels)
    hp1 = h_bu_ref[e1_idx]
    hp2 = h_bu_ref[e2_idx]
    hpA = h_td_ref[root_idx]
    d12_ref = jnp.concatenate([hpA, hp1, hp2], axis=-1)
    d21_ref = jnp.concatenate([hpA, hp2, hp1], axis=-1)

    assert d12.shape == (3 * H,) and d21.shape == (3 * H,)
    assert jnp.allclose(d12, d12_ref, atol=1e-4), "d12 mismatch vs reference"
    assert jnp.allclose(d21, d21_ref, atol=1e-4), "d21 mismatch vs reference"

    print("KERNEL_OK")
</pallas_src>

<mosaic_0001>
module attributes {stable_mosaic.version = 11 : i64} {
  func.func @_dep_layer_kernel(%arg0: i32, %arg1: memref<4xi32, #tpu.memory_space<smem>>, %arg2: memref<8x32xf32, #tpu.memory_space<vmem>>, %arg3: memref<2x8x8xbf16, #tpu.memory_space<vmem>>, %arg4: memref<8x2xi32, #tpu.memory_space<vmem>>, %arg5: memref<32x256xf32, #tpu.memory_space<vmem>>, %arg6: memref<128x256xf32, #tpu.memory_space<vmem>>, %arg7: memref<1x256xf32, #tpu.memory_space<vmem>>, %arg8: memref<2x128xf32, #tpu.memory_space<vmem>>, %arg9: memref<8x128xf32, #tpu.memory_space<vmem>>) attributes {dimension_semantics = [#tpu.dimension_semantics<arbitrary>], iteration_bounds = array<i64: 1>, scalar_prefetch = 1 : i64, scratch_operands = 1 : i64, tpu.core_type = #tpu.core_type<tc>, window_params = [{pipeline_mode = #tpu.pipeline_mode<synchronous>, transform_indices = @transform_0, window_bounds = array<i64: 8, 32>}, {pipeline_mode = #tpu.pipeline_mode<synchronous>, transform_indices = @transform_1, window_bounds = array<i64: 2, 8, 8>}, {pipeline_mode = #tpu.pipeline_mode<synchronous>, transform_indices = @transform_2, window_bounds = array<i64: 8, 2>}, {pipeline_mode = #tpu.pipeline_mode<synchronous>, transform_indices = @transform_3, window_bounds = array<i64: 32, 256>}, {pipeline_mode = #tpu.pipeline_mode<synchronous>, transform_indices = @transform_4, window_bounds = array<i64: 128, 256>}, {pipeline_mode = #tpu.pipeline_mode<synchronous>, transform_indices = @transform_5, window_bounds = array<i64: 1, 256>}, {pipeline_mode = #tpu.pipeline_mode<synchronous>, transform_indices = @transform_6, window_bounds = array<i64: 2, 128>}]} {
    %c0 = arith.constant 0 : index
    %c0_0 = arith.constant 0 : index
    %0 = vector.load %arg2[%c0, %c0_0] : memref<8x32xf32, #tpu.memory_space<vmem>>, vector<8x32xf32>
    %c0_1 = arith.constant 0 : index
    %c0_2 = arith.constant 0 : index
    %c0_3 = arith.constant 0 : index
    %1 = vector.load %arg3[%c0_1, %c0_2, %c0_3] : memref<2x8x8xbf16, #tpu.memory_space<vmem>>, vector<1x8x8xbf16>
    %2 = vector.shape_cast %1 : vector<1x8x8xbf16> to vector<8x8xbf16>
    %3 = arith.extf %2 : vector<8x8xbf16> to vector<8x8xf32>
    %c1 = arith.constant 1 : index
    %c0_4 = arith.constant 0 : index
    %c0_5 = arith.constant 0 : index
    %4 = vector.load %arg3[%c1, %c0_4, %c0_5] : memref<2x8x8xbf16, #tpu.memory_space<vmem>>, vector<1x8x8xbf16>
    %5 = vector.shape_cast %4 : vector<1x8x8xbf16> to vector<8x8xbf16>
    %6 = arith.extf %5 : vector<8x8xbf16> to vector<8x8xf32>
    %c0_6 = arith.constant 0 : index
    %c0_7 = arith.constant 0 : index
    %7 = vector.load %arg4[%c0_6, %c0_7] : memref<8x2xi32, #tpu.memory_space<vmem>>, vector<8x1xi32>
    %c0_8 = arith.constant 0 : index
    %c1_9 = arith.constant 1 : index
    %8 = vector.load %arg4[%c0_8, %c1_9] : memref<8x2xi32, #tpu.memory_space<vmem>>, vector<8x1xi32>
    %c0_10 = arith.constant 0 : index
    %c0_11 = arith.constant 0 : index
    %9 = vector.load %arg6[%c0_10, %c0_11] : memref<128x256xf32, #tpu.memory_space<vmem>>, vector<128x256xf32>
    %c0_12 = arith.constant 0 : index
    %c0_13 = arith.constant 0 : index
    %10 = vector.load %arg5[%c0_12, %c0_13] : memref<32x256xf32, #tpu.memory_space<vmem>>, vector<32x256xf32>
    %cst = arith.constant dense<0.000000e+00> : vector<8x256xf32>
    %11 = tpu.matmul %0, %10, %cst {dimension_numbers = #tpu.dot_dimension_numbers<[1], [0], [0], [1], [0, 0, 1, 1], [], []>} : vector<8x32xf32>, vector<32x256xf32>, vector<8x256xf32> -> vector<8x256xf32>
    %c0_14 = arith.constant 0 : index
    %c0_15 = arith.constant 0 : index
    %12 = vector.load %arg7[%c0_14, %c0_15] : memref<1x256xf32, #tpu.memory_space<vmem>>, vector<1x256xf32>
    %13 = vector.broadcast %12 : vector<1x256xf32> to vector<8x256xf32>
    %14 = arith.addf %11, %13 : vector<8x256xf32>
    %cst_16 = arith.constant 0.000000e+00 : f32
    %15 = vector.broadcast %cst_16 : f32 to vector<8x128xf32>
    %c0_i32 = arith.constant 0 : i32
    %16 = vector.extract_strided_slice %15 {offsets = [0, 0], sizes = [8, 64], strides = [1, 1]} : vector<8x128xf32> to vector<8x64xf32>
    %cst_17 = arith.constant dense<0.000000e+00> : vector<8x64xf32>
    %17 = tpu.matmul %3, %16, %cst_17 {dimension_numbers = #tpu.dot_dimension_numbers<[1], [0], [0], [1], [0, 0, 1, 1], [], []>} : vector<8x8xf32>, vector<8x64xf32>, vector<8x64xf32> -> vector<8x64xf32>
    %18 = vector.extract_strided_slice %15 {offsets = [0, 64], sizes = [8, 64], strides = [1, 1]} : vector<8x128xf32> to vector<8x64xf32>
    %cst_18 = arith.constant dense<0.000000e+00> : vector<8x64xf32>
    %19 = tpu.matmul %6, %18, %cst_18 {dimension_numbers = #tpu.dot_dimension_numbers<[1], [0], [0], [1], [0, 0, 1, 1], [], []>} : vector<8x8xf32>, vector<8x64xf32>, vector<8x64xf32> -> vector<8x64xf32>
    %20 = tpu.concatenate %17, %19 in 1 : vector<8x64xf32>, vector<8x64xf32> -> vector<8x128xf32>
    %cst_19 = arith.constant dense<0.000000e+00> : vector<8x256xf32>
    %21 = tpu.matmul %20, %9, %cst_19 {dimension_numbers = #tpu.dot_dimension_numbers<[1], [0], [0], [1], [0, 0, 1, 1], [], []>} : vector<8x128xf32>, vector<128x256xf32>, vector<8x256xf32> -> vector<8x256xf32>
    %22 = arith.addf %14, %21 : vector<8x256xf32>
    %23 = vector.extract_strided_slice %22 {offsets = [0, 0], sizes = [8, 192], strides = [1, 1]} : vector<8x256xf32> to vector<8x192xf32>
    %24 = arith.negf %23 : vector<8x192xf32>
    %25 = math.exp %24 : vector<8x192xf32>
    %cst_20 = arith.constant 1.000000e+00 : f32
    %26 = vector.broadcast %cst_20 : f32 to vector<8x192xf32>
    %27 = arith.addf %26, %25 : vector<8x192xf32>
    %28 = arith.divf %26, %27 : vector<8x192xf32>
    %29 = vector.extract_strided_slice %22 {offsets = [0, 192], sizes = [8, 64], strides = [1, 1]} : vector<8x256xf32> to vector<8x64xf32>
    %30 = math.tanh %29 : vector<8x64xf32>
    %31 = vector.extract_strided_slice %28 {offsets = [0, 0], sizes = [8, 32], strides = [1, 1]} : vector<8x192xf32> to vector<8x32xf32>
    %32 = vector.extract_strided_slice %30 {offsets = [0, 0], sizes = [8, 32], strides = [1, 1]} : vector<8x64xf32> to vector<8x32xf32>
    %33 = arith.mulf %31, %32 : vector<8x32xf32>
    %34 = vector.extract_strided_slice %28 {offsets = [0, 64], sizes = [8, 32], strides = [1, 1]} : vector<8x192xf32> to vector<8x32xf32>
    %35 = vector.extract_strided_slice %20 {offsets = [0, 32], sizes = [8, 32], strides = [1, 1]} : vector<8x128xf32> to vector<8x32xf32>
    %36 = arith.mulf %34, %35 : vector<8x32xf32>
    %37 = arith.addf %33, %36 : vector<8x32xf32>
    %38 = vector.extract_strided_slice %28 {offsets = [0, 96], sizes = [8, 32], strides = [1, 1]} : vector<8x192xf32> to vector<8x32xf32>
    %39 = vector.extract_strided_slice %30 {offsets = [0, 32], sizes = [8, 32], strides = [1, 1]} : vector<8x64xf32> to vector<8x32xf32>
    %40 = arith.mulf %38, %39 : vector<8x32xf32>
    %41 = vector.extract_strided_slice %28 {offsets = [0, 160], sizes = [8, 32], strides = [1, 1]} : vector<8x192xf32> to vector<8x32xf32>
    %42 = vector.extract_strided_slice %20 {offsets = [0, 96], sizes = [8, 32], strides = [1, 1]} : vector<8x128xf32> to vector<8x32xf32>
    %43 = arith.mulf %41, %42 : vector<8x32xf32>
    %44 = arith.addf %40, %43 : vector<8x32xf32>
    %45 = tpu.concatenate %37, %44 in 1 : vector<8x32xf32>, vector<8x32xf32> -> vector<8x64xf32>
    %46 = math.tanh %45 : vector<8x64xf32>
    %47 = vector.extract_strided_slice %28 {offsets = [0, 32], sizes = [8, 32], strides = [1, 1]} : vector<8x192xf32> to vector<8x32xf32>
    %48 = vector.extract_strided_slice %46 {offsets = [0, 0], sizes = [8, 32], strides = [1, 1]} : vector<8x64xf32> to vector<8x32xf32>
    %49 = arith.mulf %47, %48 : vector<8x32xf32>
    %50 = vector.extract_strided_slice %28 {offsets = [0, 128], sizes = [8, 32], strides = [1, 1]} : vector<8x192xf32> to vector<8x32xf32>
    %51 = vector.extract_strided_slice %46 {offsets = [0, 32], sizes = [8, 32], strides = [1, 1]} : vector<8x64xf32> to vector<8x32xf32>
    %52 = arith.mulf %50, %51 : vector<8x32xf32>
    %53 = vector.broadcast %c0_i32 : i32 to vector<8x1xi32>
    %54 = arith.cmpi eq, %7, %53 : vector<8x1xi32>
    %55 = tpu.concatenate %49, %37 in 1 : vector<8x32xf32>, vector<8x32xf32> -> vector<8x64xf32>
    %56 = vector.extract_strided_slice %15 {offsets = [0, 0], sizes = [8, 64], strides = [1, 1]} : vector<8x128xf32> to vector<8x64xf32>
    %57 = vector.shape_cast %54 : vector<8x1xi1> to vector<8x1xi1>
    %58 = vector.broadcast %57 : vector<8x1xi1> to vector<8x64xi1>
    %59 = arith.select %58, %55, %56 : vector<8x64xi1>, vector<8x64xf32>
    %60 = vector.broadcast %c0_i32 : i32 to vector<8x1xi32>
    %61 = arith.cmpi eq, %8, %60 : vector<8x1xi32>
    %62 = tpu.concatenate %52, %44 in 1 : vector<8x32xf32>, vector<8x32xf32> -> vector<8x64xf32>
    %63 = vector.extract_strided_slice %15 {offsets = [0, 64], sizes = [8, 64], strides = [1, 1]} : vector<8x128xf32> to vector<8x64xf32>
    %64 = vector.shape_cast %61 : vector<8x1xi1> to vector<8x1xi1>
    %65 = vector.broadcast %64 : vector<8x1xi1> to vector<8x64xi1>
    %66 = arith.select %65, %62, %63 : vector<8x64xi1>, vector<8x64xf32>
    %67 = tpu.concatenate %59, %66 in 1 : vector<8x64xf32>, vector<8x64xf32> -> vector<8x128xf32>
    %c1_i32 = arith.constant 1 : i32
    %68 = vector.extract_strided_slice %67 {offsets = [0, 0], sizes = [8, 64], strides = [1, 1]} : vector<8x128xf32> to vector<8x64xf32>
    %cst_21 = arith.constant dense<0.000000e+00> : vector<8x64xf32>
    %69 = tpu.matmul %3, %68, %cst_21 {dimension_numbers = #tpu.dot_dimension_numbers<[1], [0], [0], [1], [0, 0, 1, 1], [], []>} : vector<8x8xf32>, vector<8x64xf32>, vector<8x64xf32> -> vector<8x64xf32>
    %70 = vector.extract_strided_slice %67 {offsets = [0, 64], sizes = [8, 64], strides = [1, 1]} : vector<8x128xf32> to vector<8x64xf32>
    %cst_22 = arith.constant dense<0.000000e+00> : vector<8x64xf32>
    %71 = tpu.matmul %6, %70, %cst_22 {dimension_numbers = #tpu.dot_dimension_numbers<[1], [0], [0], [1], [0, 0, 1, 1], [], []>} : vector<8x8xf32>, vector<8x64xf32>, vector<8x64xf32> -> vector<8x64xf32>
    %72 = tpu.concatenate %69, %71 in 1 : vector<8x64xf32>, vector<8x64xf32> -> vector<8x128xf32>
    %cst_23 = arith.constant dense<0.000000e+00> : vector<8x256xf32>
    %73 = tpu.matmul %72, %9, %cst_23 {dimension_numbers = #tpu.dot_dimension_numbers<[1], [0], [0], [1], [0, 0, 1, 1], [], []>} : vector<8x128xf32>, vector<128x256xf32>, vector<8x256xf32> -> vector<8x256xf32>
    %74 = arith.addf %14, %73 : vector<8x256xf32>
    %75 = vector.extract_strided_slice %74 {offsets = [0, 0], sizes = [8, 192], strides = [1, 1]} : vector<8x256xf32> to vector<8x192xf32>
    %76 = arith.negf %75 : vector<8x192xf32>
    %77 = math.exp %76 : vector<8x192xf32>
    %cst_24 = arith.constant 1.000000e+00 : f32
    %78 = vector.broadcast %cst_24 : f32 to vector<8x192xf32>
    %79 = arith.addf %78, %77 : vector<8x192xf32>
    %80 = arith.divf %78, %79 : vector<8x192xf32>
    %81 = vector.extract_strided_slice %74 {offsets = [0, 192], sizes = [8, 64], strides = [1, 1]} : vector<8x256xf32> to vector<8x64xf32>
    %82 = math.tanh %81 : vector<8x64xf32>
    %83 = vector.extract_strided_slice %80 {offsets = [0, 0], sizes = [8, 32], strides = [1, 1]} : vector<8x192xf32> to vector<8x32xf32>
    %84 = vector.extract_strided_slice %82 {offsets = [0, 0], sizes = [8, 32], strides = [1, 1]} : vector<8x64xf32> to vector<8x32xf32>
    %85 = arith.mulf %83, %84 : vector<8x32xf32>
    %86 = vector.extract_strided_slice %80 {offsets = [0, 64], sizes = [8, 32], strides = [1, 1]} : vector<8x192xf32> to vector<8x32xf32>
    %87 = vector.extract_strided_slice %72 {offsets = [0, 32], sizes = [8, 32], strides = [1, 1]} : vector<8x128xf32> to vector<8x32xf32>
    %88 = arith.mulf %86, %87 : vector<8x32xf32>
    %89 = arith.addf %85, %88 : vector<8x32xf32>
    %90 = vector.extract_strided_slice %80 {offsets = [0, 96], sizes = [8, 32], strides = [1, 1]} : vector<8x192xf32> to vector<8x32xf32>
    %91 = vector.extract_strided_slice %82 {offsets = [0, 32], sizes = [8, 32], strides = [1, 1]} : vector<8x64xf32> to vector<8x32xf32>
    %92 = arith.mulf %90, %91 : vector<8x32xf32>
    %93 = vector.extract_strided_slice %80 {offsets = [0, 160], sizes = [8, 32], strides = [1, 1]} : vector<8x192xf32> to vector<8x32xf32>
    %94 = vector.extract_strided_slice %72 {offsets = [0, 96], sizes = [8, 32], strides = [1, 1]} : vector<8x128xf32> to vector<8x32xf32>
    %95 = arith.mulf %93, %94 : vector<8x32xf32>
    %96 = arith.addf %92, %95 : vector<8x32xf32>
    %97 = tpu.concatenate %89, %96 in 1 : vector<8x32xf32>, vector<8x32xf32> -> vector<8x64xf32>
    %98 = math.tanh %97 : vector<8x64xf32>
    %99 = vector.extract_strided_slice %80 {offsets = [0, 32], sizes = [8, 32], strides = [1, 1]} : vector<8x192xf32> to vector<8x32xf32>
    %100 = vector.extract_strided_slice %98 {offsets = [0, 0], sizes = [8, 32], strides = [1, 1]} : vector<8x64xf32> to vector<8x32xf32>
    %101 = arith.mulf %99, %100 : vector<8x32xf32>
    %102 = vector.extract_strided_slice %80 {offsets = [0, 128], sizes = [8, 32], strides = [1, 1]} : vector<8x192xf32> to vector<8x32xf32>
    %103 = vector.extract_strided_slice %98 {offsets = [0, 32], sizes = [8, 32], strides = [1, 1]} : vector<8x64xf32> to vector<8x32xf32>
    %104 = arith.mulf %102, %103 : vector<8x32xf32>
    %105 = vector.broadcast %c1_i32 : i32 to vector<8x1xi32>
    %106 = arith.cmpi eq, %7, %105 : vector<8x1xi32>
    %107 = tpu.concatenate %101, %89 in 1 : vector<8x32xf32>, vector<8x32xf32> -> vector<8x64xf32>
    %108 = vector.extract_strided_slice %67 {offsets = [0, 0], sizes = [8, 64], strides = [1, 1]} : vector<8x128xf32> to vector<8x64xf32>
    %109 = vector.shape_cast %106 : vector<8x1xi1> to vector<8x1xi1>
    %110 = vector.broadcast %109 : vector<8x1xi1> to vector<8x64xi1>
    %111 = arith.select %110, %107, %108 : vector<8x64xi1>, vector<8x64xf32>
    %112 = vector.broadcast %c1_i32 : i32 to vector<8x1xi32>
    %113 = arith.cmpi eq, %8, %112 : vector<8x1xi32>
    %114 = tpu.concatenate %104, %96 in 1 : vector<8x32xf32>, vector<8x32xf32> -> vector<8x64xf32>
    %115 = vector.extract_strided_slice %67 {offsets = [0, 64], sizes = [8, 64], strides = [1, 1]} : vector<8x128xf32> to vector<8x64xf32>
    %116 = vector.shape_cast %113 : vector<8x1xi1> to vector<8x1xi1>
    %117 = vector.broadcast %116 : vector<8x1xi1> to vector<8x64xi1>
    %118 = arith.select %117, %114, %115 : vector<8x64xi1>, vector<8x64xf32>
    %119 = tpu.concatenate %111, %118 in 1 : vector<8x64xf32>, vector<8x64xf32> -> vector<8x128xf32>
    %c2_i32 = arith.constant 2 : i32
    %120 = vector.extract_strided_slice %119 {offsets = [0, 0], sizes = [8, 64], strides = [1, 1]} : vector<8x128xf32> to vector<8x64xf32>
    %cst_25 = arith.constant dense<0.000000e+00> : vector<8x64xf32>
    %121 = tpu.matmul %3, %120, %cst_25 {dimension_numbers = #tpu.dot_dimension_numbers<[1], [0], [0], [1], [0, 0, 1, 1], [], []>} : vector<8x8xf32>, vector<8x64xf32>, vector<8x64xf32> -> vector<8x64xf32>
    %122 = vector.extract_strided_slice %119 {offsets = [0, 64], sizes = [8, 64], strides = [1, 1]} : vector<8x128xf32> to vector<8x64xf32>
    %cst_26 = arith.constant dense<0.000000e+00> : vector<8x64xf32>
    %123 = tpu.matmul %6, %122, %cst_26 {dimension_numbers = #tpu.dot_dimension_numbers<[1], [0], [0], [1], [0, 0, 1, 1], [], []>} : vector<8x8xf32>, vector<8x64xf32>, vector<8x64xf32> -> vector<8x64xf32>
    %124 = tpu.concatenate %121, %123 in 1 : vector<8x64xf32>, vector<8x64xf32> -> vector<8x128xf32>
    %cst_27 = arith.constant dense<0.000000e+00> : vector<8x256xf32>
    %125 = tpu.matmul %124, %9, %cst_27 {dimension_numbers = #tpu.dot_dimension_numbers<[1], [0], [0], [1], [0, 0, 1, 1], [], []>} : vector<8x128xf32>, vector<128x256xf32>, vector<8x256xf32> -> vector<8x256xf32>
    %126 = arith.addf %14, %125 : vector<8x256xf32>
    %127 = vector.extract_strided_slice %126 {offsets = [0, 0], sizes = [8, 192], strides = [1, 1]} : vector<8x256xf32> to vector<8x192xf32>
    %128 = arith.negf %127 : vector<8x192xf32>
    %129 = math.exp %128 : vector<8x192xf32>
    %cst_28 = arith.constant 1.000000e+00 : f32
    %130 = vector.broadcast %cst_28 : f32 to vector<8x192xf32>
    %131 = arith.addf %130, %129 : vector<8x192xf32>
    %132 = arith.divf %130, %131 : vector<8x192xf32>
    %133 = vector.extract_strided_slice %126 {offsets = [0, 192], sizes = [8, 64], strides = [1, 1]} : vector<8x256xf32> to vector<8x64xf32>
    %134 = math.tanh %133 : vector<8x64xf32>
    %135 = vector.extract_strided_slice %132 {offsets = [0, 0], sizes = [8, 32], strides = [1, 1]} : vector<8x192xf32> to vector<8x32xf32>
    %136 = vector.extract_strided_slice %134 {offsets = [0, 0], sizes = [8, 32], strides = [1, 1]} : vector<8x64xf32> to vector<8x32xf32>
    %137 = arith.mulf %135, %136 : vector<8x32xf32>
    %138 = vector.extract_strided_slice %132 {offsets = [0, 64], sizes = [8, 32], strides = [1, 1]} : vector<8x192xf32> to vector<8x32xf32>
    %139 = vector.extract_strided_slice %124 {offsets = [0, 32], sizes = [8, 32], strides = [1, 1]} : vector<8x128xf32> to vector<8x32xf32>
    %140 = arith.mulf %138, %139 : vector<8x32xf32>
    %141 = arith.addf %137, %140 : vector<8x32xf32>
    %142 = vector.extract_strided_slice %132 {offsets = [0, 96], sizes = [8, 32], strides = [1, 1]} : vector<8x192xf32> to vector<8x32xf32>
    %143 = vector.extract_strided_slice %134 {offsets = [0, 32], sizes = [8, 32], strides = [1, 1]} : vector<8x64xf32> to vector<8x32xf32>
    %144 = arith.mulf %142, %143 : vector<8x32xf32>
    %145 = vector.extract_strided_slice %132 {offsets = [0, 160], sizes = [8, 32], strides = [1, 1]} : vector<8x192xf32> to vector<8x32xf32>
    %146 = vector.extract_strided_slice %124 {offsets = [0, 96], sizes = [8, 32], strides = [1, 1]} : vector<8x128xf32> to vector<8x32xf32>
    %147 = arith.mulf %145, %146 : vector<8x32xf32>
    %148 = arith.addf %144, %147 : vector<8x32xf32>
    %149 = tpu.concatenate %141, %148 in 1 : vector<8x32xf32>, vector<8x32xf32> -> vector<8x64xf32>
    %150 = math.tanh %149 : vector<8x64xf32>
    %151 = vector.extract_strided_slice %132 {offsets = [0, 32], sizes = [8, 32], strides = [1, 1]} : vector<8x192xf32> to vector<8x32xf32>
    %152 = vector.extract_strided_slice %150 {offsets = [0, 0], sizes = [8, 32], strides = [1, 1]} : vector<8x64xf32> to vector<8x32xf32>
    %153 = arith.mulf %151, %152 : vector<8x32xf32>
    %154 = vector.extract_strided_slice %132 {offsets = [0, 128], sizes = [8, 32], strides = [1, 1]} : vector<8x192xf32> to vector<8x32xf32>
    %155 = vector.extract_strided_slice %150 {offsets = [0, 32], sizes = [8, 32], strides = [1, 1]} : vector<8x64xf32> to vector<8x32xf32>
    %156 = arith.mulf %154, %155 : vector<8x32xf32>
    %157 = vector.broadcast %c2_i32 : i32 to vector<8x1xi32>
    %158 = arith.cmpi eq, %7, %157 : vector<8x1xi32>
    %159 = tpu.concatenate %153, %141 in 1 : vector<8x32xf32>, vector<8x32xf32> -> vector<8x64xf32>
    %160 = vector.extract_strided_slice %119 {offsets = [0, 0], sizes = [8, 64], strides = [1, 1]} : vector<8x128xf32> to vector<8x64xf32>
    %161 = vector.shape_cast %158 : vector<8x1xi1> to vector<8x1xi1>
    %162 = vector.broadcast %161 : vector<8x1xi1> to vector<8x64xi1>
    %163 = arith.select %162, %159, %160 : vector<8x64xi1>, vector<8x64xf32>
    %164 = vector.broadcast %c2_i32 : i32 to vector<8x1xi32>
    %165 = arith.cmpi eq, %8, %164 : vector<8x1xi32>
    %166 = tpu.concatenate %156, %148 in 1 : vector<8x32xf32>, vector<8x32xf32> -> vector<8x64xf32>
    %167 = vector.extract_strided_slice %119 {offsets = [0, 64], sizes = [8, 64], strides = [1, 1]} : vector<8x128xf32> to vector<8x64xf32>
    %168 = vector.shape_cast %165 : vector<8x1xi1> to vector<8x1xi1>
    %169 = vector.broadcast %168 : vector<8x1xi1> to vector<8x64xi1>
    %170 = arith.select %169, %166, %167 : vector<8x64xi1>, vector<8x64xf32>
    %171 = tpu.concatenate %163, %170 in 1 : vector<8x64xf32>, vector<8x64xf32> -> vector<8x128xf32>
    %c3_i32 = arith.constant 3 : i32
    %172 = vector.extract_strided_slice %171 {offsets = [0, 0], sizes = [8, 64], strides = [1, 1]} : vector<8x128xf32> to vector<8x64xf32>
    %cst_29 = arith.constant dense<0.000000e+00> : vector<8x64xf32>
    %173 = tpu.matmul %3, %172, %cst_29 {dimension_numbers = #tpu.dot_dimension_numbers<[1], [0], [0], [1], [0, 0, 1, 1], [], []>} : vector<8x8xf32>, vector<8x64xf32>, vector<8x64xf32> -> vector<8x64xf32>
    %174 = vector.extract_strided_slice %171 {offsets = [0, 64], sizes = [8, 64], strides = [1, 1]} : vector<8x128xf32> to vector<8x64xf32>
    %cst_30 = arith.constant dense<0.000000e+00> : vector<8x64xf32>
    %175 = tpu.matmul %6, %174, %cst_30 {dimension_numbers = #tpu.dot_dimension_numbers<[1], [0], [0], [1], [0, 0, 1, 1], [], []>} : vector<8x8xf32>, vector<8x64xf32>, vector<8x64xf32> -> vector<8x64xf32>
    %176 = tpu.concatenate %173, %175 in 1 : vector<8x64xf32>, vector<8x64xf32> -> vector<8x128xf32>
    %cst_31 = arith.constant dense<0.000000e+00> : vector<8x256xf32>
    %177 = tpu.matmul %176, %9, %cst_31 {dimension_numbers = #tpu.dot_dimension_numbers<[1], [0], [0], [1], [0, 0, 1, 1], [], []>} : vector<8x128xf32>, vector<128x256xf32>, vector<8x256xf32> -> vector<8x256xf32>
    %178 = arith.addf %14, %177 : vector<8x256xf32>
    %179 = vector.extract_strided_slice %178 {offsets = [0, 0], sizes = [8, 192], strides = [1, 1]} : vector<8x256xf32> to vector<8x192xf32>
    %180 = arith.negf %179 : vector<8x192xf32>
    %181 = math.exp %180 : vector<8x192xf32>
    %cst_32 = arith.constant 1.000000e+00 : f32
    %182 = vector.broadcast %cst_32 : f32 to vector<8x192xf32>
    %183 = arith.addf %182, %181 : vector<8x192xf32>
    %184 = arith.divf %182, %183 : vector<8x192xf32>
    %185 = vector.extract_strided_slice %178 {offsets = [0, 192], sizes = [8, 64], strides = [1, 1]} : vector<8x256xf32> to vector<8x64xf32>
    %186 = math.tanh %185 : vector<8x64xf32>
    %187 = vector.extract_strided_slice %184 {offsets = [0, 0], sizes = [8, 32], strides = [1, 1]} : vector<8x192xf32> to vector<8x32xf32>
    %188 = vector.extract_strided_slice %186 {offsets = [0, 0], sizes = [8, 32], strides = [1, 1]} : vector<8x64xf32> to vector<8x32xf32>
    %189 = arith.mulf %187, %188 : vector<8x32xf32>
    %190 = vector.extract_strided_slice %184 {offsets = [0, 64], sizes = [8, 32], strides = [1, 1]} : vector<8x192xf32> to vector<8x32xf32>
    %191 = vector.extract_strided_slice %176 {offsets = [0, 32], sizes = [8, 32], strides = [1, 1]} : vector<8x128xf32> to vector<8x32xf32>
    %192 = arith.mulf %190, %191 : vector<8x32xf32>
    %193 = arith.addf %189, %192 : vector<8x32xf32>
    %194 = vector.extract_strided_slice %184 {offsets = [0, 96], sizes = [8, 32], strides = [1, 1]} : vector<8x192xf32> to vector<8x32xf32>
    %195 = vector.extract_strided_slice %186 {offsets = [0, 32], sizes = [8, 32], strides = [1, 1]} : vector<8x64xf32> to vector<8x32xf32>
    %196 = arith.mulf %194, %195 : vector<8x32xf32>
    %197 = vector.extract_strided_slice %184 {offsets = [0, 160], sizes = [8, 32], strides = [1, 1]} : vector<8x192xf32> to vector<8x32xf32>
    %198 = vector.extract_strided_slice %176 {offsets = [0, 96], sizes = [8, 32], strides = [1, 1]} : vector<8x128xf32> to vector<8x32xf32>
    %199 = arith.mulf %197, %198 : vector<8x32xf32>
    %200 = arith.addf %196, %199 : vector<8x32xf32>
    %201 = tpu.concatenate %193, %200 in 1 : vector<8x32xf32>, vector<8x32xf32> -> vector<8x64xf32>
    %202 = math.tanh %201 : vector<8x64xf32>
    %203 = vector.extract_strided_slice %184 {offsets = [0, 32], sizes = [8, 32], strides = [1, 1]} : vector<8x192xf32> to vector<8x32xf32>
    %204 = vector.extract_strided_slice %202 {offsets = [0, 0], sizes = [8, 32], strides = [1, 1]} : vector<8x64xf32> to vector<8x32xf32>
    %205 = arith.mulf %203, %204 : vector<8x32xf32>
    %206 = vector.extract_strided_slice %184 {offsets = [0, 128], sizes = [8, 32], strides = [1, 1]} : vector<8x192xf32> to vector<8x32xf32>
    %207 = vector.extract_strided_slice %202 {offsets = [0, 32], sizes = [8, 32], strides = [1, 1]} : vector<8x64xf32> to vector<8x32xf32>
    %208 = arith.mulf %206, %207 : vector<8x32xf32>
    %209 = vector.broadcast %c3_i32 : i32 to vector<8x1xi32>
    %210 = arith.cmpi eq, %7, %209 : vector<8x1xi32>
    %211 = tpu.concatenate %205, %193 in 1 : vector<8x32xf32>, vector<8x32xf32> -> vector<8x64xf32>
    %212 = vector.extract_strided_slice %171 {offsets = [0, 0], sizes = [8, 64], strides = [1, 1]} : vector<8x128xf32> to vector<8x64xf32>
    %213 = vector.shape_cast %210 : vector<8x1xi1> to vector<8x1xi1>
    %214 = vector.broadcast %213 : vector<8x1xi1> to vector<8x64xi1>
    %215 = arith.select %214, %211, %212 : vector<8x64xi1>, vector<8x64xf32>
    %216 = vector.broadcast %c3_i32 : i32 to vector<8x1xi32>
    %217 = arith.cmpi eq, %8, %216 : vector<8x1xi32>
    %218 = tpu.concatenate %208, %200 in 1 : vector<8x32xf32>, vector<8x32xf32> -> vector<8x64xf32>
    %219 = vector.extract_strided_slice %171 {offsets = [0, 64], sizes = [8, 64], strides = [1, 1]} : vector<8x128xf32> to vector<8x64xf32>
    %220 = vector.shape_cast %217 : vector<8x1xi1> to vector<8x1xi1>
    %221 = vector.broadcast %220 : vector<8x1xi1> to vector<8x64xi1>
    %222 = arith.select %221, %218, %219 : vector<8x64xi1>, vector<8x64xf32>
    %223 = tpu.concatenate %215, %222 in 1 : vector<8x64xf32>, vector<8x64xf32> -> vector<8x128xf32>
    %c4_i32 = arith.constant 4 : i32
    %c0_33 = arith.constant 0 : index
    %c0_34 = arith.constant 0 : index
    %224 = vector.load %arg9[%c0_33, %c0_34] : memref<8x128xf32, #tpu.memory_space<vmem>>, vector<8x128xf32>
    tpu.vector_store %arg9[%c0_33, %c0_34], %223 {strides = array<i32>} : memref<8x128xf32, #tpu.memory_space<vmem>>, vector<8x128xf32>,
    %c0_35 = arith.constant 0 : index
    %225 = memref.load %arg1[%c0_35] : memref<4xi32, #tpu.memory_space<smem>>
    %226 = arith.index_cast %225 : i32 to index
    %c0_36 = arith.constant 0 : index
    %227 = vector.load %arg9[%226, %c0_36] : memref<8x128xf32, #tpu.memory_space<vmem>>, vector<1x128xf32>
    %c1_37 = arith.constant 1 : index
    %228 = memref.load %arg1[%c1_37] : memref<4xi32, #tpu.memory_space<smem>>
    %229 = arith.index_cast %228 : i32 to index
    %c0_38 = arith.constant 0 : index
    %230 = vector.load %arg9[%229, %c0_38] : memref<8x128xf32, #tpu.memory_space<vmem>>, vector<1x128xf32>
    %c2 = arith.constant 2 : index
    %231 = memref.load %arg1[%c2] : memref<4xi32, #tpu.memory_space<smem>>
    %232 = arith.index_cast %231 : i32 to index
    %c0_39 = arith.constant 0 : index
    %233 = vector.load %arg9[%232, %c0_39] : memref<8x128xf32, #tpu.memory_space<vmem>>, vector<1x128xf32>
    %234 = vector.extract_strided_slice %227 {offsets = [0, 0], sizes = [1, 32], strides = [1, 1]} : vector<1x128xf32> to vector<1x32xf32>
    %235 = vector.extract_strided_slice %230 {offsets = [0, 0], sizes = [1, 32], strides = [1, 1]} : vector<1x128xf32> to vector<1x32xf32>
    %236 = vector.extract_strided_slice %233 {offsets = [0, 64], sizes = [1, 32], strides = [1, 1]} : vector<1x128xf32> to vector<1x32xf32>
    %cst_40 = arith.constant 0.000000e+00 : f32
    %237 = vector.broadcast %cst_40 : f32 to vector<1x32xf32>
    %238 = tpu.concatenate %236, %234, %235, %237 in 1 : vector<1x32xf32>, vector<1x32xf32>, vector<1x32xf32>, vector<1x32xf32> -> vector<1x128xf32>
    %239 = tpu.concatenate %236, %235, %234, %237 in 1 : vector<1x32xf32>, vector<1x32xf32>, vector<1x32xf32>, vector<1x32xf32> -> vector<1x128xf32>
    %240 = tpu.concatenate %238, %239 in 0 : vector<1x128xf32>, vector<1x128xf32> -> vector<2x128xf32>
    %c0_41 = arith.constant 0 : index
    %c0_42 = arith.constant 0 : index
    %241 = vector.load %arg8[%c0_41, %c0_42] : memref<2x128xf32, #tpu.memory_space<vmem>>, vector<2x128xf32>
    tpu.vector_store %arg8[%c0_41, %c0_42], %240 {strides = array<i32>} : memref<2x128xf32, #tpu.memory_space<vmem>>, vector<2x128xf32>,
    return
  }
  func.func @transform_0(%arg0: i32, %arg1: memref<4xi32, #tpu.memory_space<smem>>) -> (i32, i32) {
    %c0_i32 = arith.constant 0 : i32
    %c0_i32_0 = arith.constant 0 : i32
    %c0_i32_1 = arith.constant 0 : i32
    return %c0_i32, %c0_i32_0 : i32, i32
  }
  func.func @transform_1(%arg0: i32, %arg1: memref<4xi32, #tpu.memory_space<smem>>) -> (i32, i32, i32) {
    %c0_i32 = arith.constant 0 : i32
    %c0_i32_0 = arith.constant 0 : i32
    %c0_i32_1 = arith.constant 0 : i32
    %c0_i32_2 = arith.constant 0 : i32
    return %c0_i32, %c0_i32_0, %c0_i32_1 : i32, i32, i32
  }
  func.func @transform_2(%arg0: i32, %arg1: memref<4xi32, #tpu.memory_space<smem>>) -> (i32, i32) {
    %c0_i32 = arith.constant 0 : i32
    %c0_i32_0 = arith.constant 0 : i32
    %c0_i32_1 = arith.constant 0 : i32
    return %c0_i32, %c0_i32_0 : i32, i32
  }
  func.func @transform_3(%arg0: i32, %arg1: memref<4xi32, #tpu.memory_space<smem>>) -> (i32, i32) {
    %c0_i32 = arith.constant 0 : i32
    %c0_i32_0 = arith.constant 0 : i32
    %c0_i32_1 = arith.constant 0 : i32
    return %c0_i32, %c0_i32_0 : i32, i32
  }
  func.func @transform_4(%arg0: i32, %arg1: memref<4xi32, #tpu.memory_space<smem>>) -> (i32, i32) {
    %c0_i32 = arith.constant 0 : i32
    %c0_i32_0 = arith.constant 0 : i32
    %c0_i32_1 = arith.constant 0 : i32
    return %c0_i32, %c0_i32_0 : i32, i32
  }
  func.func @transform_5(%arg0: i32, %arg1: memref<4xi32, #tpu.memory_space<smem>>) -> (i32, i32) {
    %c0_i32 = arith.constant 0 : i32
    %c0_i32_0 = arith.constant 0 : i32
    %c0_i32_1 = arith.constant 0 : i32
    return %c0_i32, %c0_i32_0 : i32, i32
  }
  func.func @transform_6(%arg0: i32, %arg1: memref<4xi32, #tpu.memory_space<smem>>) -> (i32, i32) {
    %c0_i32 = arith.constant 0 : i32
    %c0_i32_0 = arith.constant 0 : i32
    %c0_i32_1 = arith.constant 0 : i32
    return %c0_i32, %c0_i32_0 : i32, i32
  }
}

</mosaic_0001>

<llo_original>
// kernel: tpu_custom_call.1
$region0: #{tpu_custom_call.1}
  #allocation0 [shape = 'u32[]', space=smem, size = 0x4, offset = 0x4, fixed_abs, tag = 'smem constant byte address 0x4 - core index']
  #allocation1 [shape = 'u32[144,128]{1,0:T(1,128)}', space=vmem, size = 0x12000, scoped, tag = 'internal scratch']
  #allocation2 [shape = 'f32[8,128]{1,0:T(8,128)}', space=vmem, size = 0x1000, scoped, tag = 'scratch operand']
  #allocation3 [shape = 's32[1]{0}', space=sflag, size = 0x4, scoped, tag = 'scoped memory for tpu_custom_call.1']
  #allocation4 [shape = 'u8[512]{0}', space=smem, size = 0x200, scoped, tag = 'prefetched SMEM operand 0']
  %s0 = inlined_call_operand.vmem [shape: s32[4], index: 0, kind: input, shape index: {}]
  %s1 = inlined_call_operand.vmem [shape: f32[8,32], index: 1, kind: input, shape index: {}]
  %s2 = inlined_call_operand.vmem [shape: bf16[2,8,8], index: 2, kind: input, shape index: {}]
  %s3 = inlined_call_operand.vmem [shape: s32[8,2], index: 3, kind: input, shape index: {}]
  %s4 = inlined_call_operand.hbm [shape: f32[32,256], index: 4, kind: input, shape index: {}]
  %s5 = inlined_call_operand.hbm [shape: f32[128,256], index: 5, kind: input, shape index: {}]
  %s6 = inlined_call_operand.vmem [shape: f32[1,256], index: 6, kind: input, shape index: {}]
  %s7 = inlined_call_operand.hbm [shape: f32[2,128], index: 7, kind: output, shape index: {}]
  %s8 = sld [smem:[#allocation0]]
  $region42: #{tpu_custom_call.1} parent=0
    _
  %s10 = ssub.s32 1, %s8
  %s11 = scalar_select 0, %s10, %s8
  %s12 = sshll.u32 %s0, 4
  %s13 = int_to_ptr.vmem [resolvable:$true] %s12
  %15 = dma.vmem_to_smem %s13, 16, [#allocation4], [#allocation3]
  %16 = dma.done [#allocation3], 16
  %17 = sfence
  $region1: #{tpu_custom_call.1} parent=0
    #allocation5 [shape = 'u8[32768]{0}', space=vmem, size = 0x8000, scoped, tag = 'input window, operand 4, single buffered']
    #allocation6 [shape = 's32[1]{0}', space=sflag, size = 0x4, scoped, tag = 'scoped memory for tpu_custom_call.1']
    #allocation7 [shape = 's32[1]{0}', space=sflag, size = 0x4, scoped, tag = 'scoped memory for tpu_custom_call.1']
    #allocation8 [shape = 'u8[131072]{0}', space=vmem, size = 0x20000, scoped, tag = 'input window, operand 5, single buffered']
    #allocation9 [shape = 's32[1]{0}', space=sflag, size = 0x4, scoped, tag = 'scoped memory for tpu_custom_call.1']
    #allocation10 [shape = 'u8[1024]{0}', space=vmem, size = 0x400, scoped, tag = 'output window, operand 0, single buffered']
    %18 = vsyncpa [#allocation6], 0
    %19 = vsyncpa [#allocation9], 0
    %20 = vsyncpa [#allocation7], 0
    // Predicated region
    $region2: #{tpu_custom_call.1} parent=1 // pred_check
      _
    $region3: #{tpu_custom_call.1} parent=1 // pred_check_branch
      %22 = sbr.rel (0) target = $region5
    $region4: #{tpu_custom_call.1} parent=1 // pred_region
      _
    $region5: #{tpu_custom_call.1} parent=1 // pred_fallthru
      _
    // Predicated region
    $region6: #{tpu_custom_call.1} parent=1 // pred_check
      _
    $region7: #{tpu_custom_call.1} parent=1 // pred_check_branch
      %24 = sbr.rel (0) target = $region9
    $region8: #{tpu_custom_call.1} parent=1 // pred_region
      _
    $region9: #{tpu_custom_call.1} parent=1 // pred_fallthru
      _
    // Predicated region
    $region10: #{tpu_custom_call.1} parent=1 // pred_check
      _
    $region11: #{tpu_custom_call.1} parent=1 // pred_check_branch
      %26 = sbr.rel (0) target = $region13
    $region12: #{tpu_custom_call.1} parent=1 // pred_region
      _
    $region13: #{tpu_custom_call.1} parent=1 // pred_fallthru
      _
    // Predicated region
    $region14: #{tpu_custom_call.1} parent=1 // pred_check
      _
    $region15: #{tpu_custom_call.1} parent=1 // pred_check_branch
      %28 = sbr.rel (0) target = $region17
    $region16: #{tpu_custom_call.1} parent=1 // pred_region
      %s30 = ssub.s32 1024, 1024
      %31 = vsyncadd [#allocation6], %s30
      %s32 = sshll.u32 [#allocation5], 4
      %s33 = int_to_ptr.vmem [resolvable:$true] %s32
      %38 = dma.hbm_to_vmem [thread:$0]  %s4, 1024, %s33, [#allocation6], 256, 256, 16
    $region17: #{tpu_custom_call.1} parent=1 // pred_fallthru
      _
    // Predicated region
    $region18: #{tpu_custom_call.1} parent=1 // pred_check
      _
    $region19: #{tpu_custom_call.1} parent=1 // pred_check_branch
      %40 = sbr.rel (0) target = $region21
    $region20: #{tpu_custom_call.1} parent=1 // pred_region
      %s42 = ssub.s32 4096, 4096
      %43 = vsyncadd [#allocation9], %s42
      %s44 = sshll.u32 [#allocation8], 4
      %s45 = int_to_ptr.vmem [resolvable:$true] %s44
      %50 = dma.hbm_to_vmem [thread:$0]  %s5, 4096, %s45, [#allocation9], 256, 256, 16
    $region21: #{tpu_custom_call.1} parent=1 // pred_fallthru
      _
    // Predicated region
    $region22: #{tpu_custom_call.1} parent=1 // pred_check
      _
    $region23: #{tpu_custom_call.1} parent=1 // pred_check_branch
      %52 = sbr.rel (0) target = $region25
    $region24: #{tpu_custom_call.1} parent=1 // pred_region
      _
    $region25: #{tpu_custom_call.1} parent=1 // pred_fallthru
      _
    // Predicated region
    $region26: #{tpu_custom_call.1} parent=1 // pred_check
      _
    $region27: #{tpu_custom_call.1} parent=1 // pred_check_branch
      %54 = sbr.rel (0) target = $region29
    $region28: #{tpu_custom_call.1} parent=1 // pred_region
      %55 = dma.done [#allocation6], 1024
    $region29: #{tpu_custom_call.1} parent=1 // pred_fallthru
      _
    // Predicated region
    $region30: #{tpu_custom_call.1} parent=1 // pred_check
      _
    $region31: #{tpu_custom_call.1} parent=1 // pred_check_branch
      %57 = sbr.rel (0) target = $region33
    $region32: #{tpu_custom_call.1} parent=1 // pred_region
      %58 = dma.done [#allocation9], 4096
    $region33: #{tpu_custom_call.1} parent=1 // pred_fallthru
      _
    %v59 = vld [vmem:[%s1] sm:$0xff]
    %v60 = vld [vmem:[%s2] sm:$0xf]
    %v61 = vunpack.c.l.bf16 %v60
    %s62 = scalar_lea.vmem %s2, 4
    %v63 = vld [vmem:[%s62] sm:$0xf]
    %v64 = vunpack.c.l.bf16 %v63
    %v65 = vld [vmem:[%s3] sm:$0xff]
    %v66 = vld [vmem:[#allocation8] sm:$0xff]
    %v67 = vld [vmem:[#allocation8 + $0x8] sm:$0xff]
    %v68 = vld [vmem:[#allocation8 + $0x10] sm:$0xff]
    %v69 = vld [vmem:[#allocation8 + $0x18] sm:$0xff]
    %v70 = vld [vmem:[#allocation8 + $0x20] sm:$0xff]
    %v71 = vld [vmem:[#allocation8 + $0x28] sm:$0xff]
    %v72 = vld [vmem:[#allocation8 + $0x30] sm:$0xff]
    %v73 = vld [vmem:[#allocation8 + $0x38] sm:$0xff]
    %v74 = vld [vmem:[#allocation8 + $0x40] sm:$0xff]
    %v75 = vld [vmem:[#allocation8 + $0x48] sm:$0xff]
    %v76 = vld [vmem:[#allocation8 + $0x50] sm:$0xff]
    %v77 = vld [vmem:[#allocation8 + $0x58] sm:$0xff]
    %v78 = vld [vmem:[#allocation8 + $0x60] sm:$0xff]
    %v79 = vld [vmem:[#allocation8 + $0x68] sm:$0xff]
    %v80 = vld [vmem:[#allocation8 + $0x70] sm:$0xff]
    %v81 = vld [vmem:[#allocation8 + $0x78] sm:$0xff]
    %v82 = vld [vmem:[#allocation8 + $0x80] sm:$0xff]
    %v83 = vld [vmem:[#allocation8 + $0x88] sm:$0xff]
    %v84 = vld [vmem:[#allocation8 + $0x90] sm:$0xff]
    %v85 = vld [vmem:[#allocation8 + $0x98] sm:$0xff]
    %v86 = vld [vmem:[#allocation8 + $0xa0] sm:$0xff]
    %v87 = vld [vmem:[#allocation8 + $0xa8] sm:$0xff]
    %v88 = vld [vmem:[#allocation8 + $0xb0] sm:$0xff]
    %v89 = vld [vmem:[#allocation8 + $0xb8] sm:$0xff]
    %v90 = vld [vmem:[#allocation8 + $0xc0] sm:$0xff]
    %v91 = vld [vmem:[#allocation8 + $0xc8] sm:$0xff]
    %v92 = vld [vmem:[#allocation8 + $0xd0] sm:$0xff]
    %v93 = vld [vmem:[#allocation8 + $0xd8] sm:$0xff]
    %v94 = vld [vmem:[#allocation8 + $0xe0] sm:$0xff]
    %v95 = vld [vmem:[#allocation8 + $0xe8] sm:$0xff]
    %v96 = vld [vmem:[#allocation8 + $0xf0] sm:$0xff]
    %v97 = vld [vmem:[#allocation8 + $0xf8] sm:$0xff]
    %v98 = vld [vmem:[#allocation5] sm:$0xff]
    %v99 = vld [vmem:[#allocation5 + $0x8] sm:$0xff]
    %v100 = vld [vmem:[#allocation5 + $0x10] sm:$0xff]
    %v101 = vld [vmem:[#allocation5 + $0x18] sm:$0xff]
    %v102 = vld [vmem:[#allocation5 + $0x20] sm:$0xff]
    %v103 = vld [vmem:[#allocation5 + $0x28] sm:$0xff]
    %v104 = vld [vmem:[#allocation5 + $0x30] sm:$0xff]
    %v105 = vld [vmem:[#allocation5 + $0x38] sm:$0xff]
    %v106 = vld [vmem:[%s6] sm:$0x3]
    %v108 = vlaneseq
    %v109 = vshrl.u32 %v108, 7
    %v110 = vsub.s32 0, %v109
    %v111 = vrot.slane %v106, %v110
    %v112 = vlaneseq
    %v113 = vshrl.u32 %v112, 7
    %v114 = vsub.s32 1, %v113
    %v115 = vrot.slane %v106, %v114
    %vm118 = vcmask 261120
    %v120 = vsel %vm118, %v59, 0
    %122 = vmatprep.subr.mxu0 %v99
    %123 = vmatpush1.msra.mxu0 %v98
    %124 = vmatprep.subr.mxu0 %v101
    %125 = vmatpush1.msra.mxu0 %v100
    %126 = vmatprep.subr.mxu0 %v103
    %127 = vmatpush1.msra.mxu0 %v102
    %128 = vmatprep.subr.mxu0 %v105
    %129 = vmatpush1.msra.mxu0 %v104
    %130 = vmatprep.subr.mxu0 0.0
    %131 = vmatpush1.msra.mxu0 0.0
    %132 = vmatprep.subr.mxu0 0.0
    %133 = vmatpush1.msra.mxu0 0.0
    %134 = vmatprep.subr.mxu0 0.0
    %135 = vmatpush1.msra.mxu0 0.0
    %136 = vmatprep.subr.mxu0 0.0
    %137 = vmatpush1.msra.mxu0 0.0
    %138 = vmatprep.subr.mxu0 0.0
    %139 = vmatpush1.msra.mxu0 0.0
    %140 = vmatprep.subr.mxu0 0.0
    %141 = vmatpush1.msra.mxu0 0.0
    %142 = vmatprep.subr.mxu0 0.0
    %143 = vmatpush1.msra.mxu0 0.0
    %144 = vmatprep.subr.mxu0 0.0
    %145 = vmatpush1.msra.mxu0 0.0
    %146 = vmatprep.subr.mxu0 0.0
    %147 = vmatpush1.msra.mxu0 0.0
    %148 = vmatprep.subr.mxu0 0.0
    %149 = vmatpush1.msra.mxu0 0.0
    %150 = vmatprep.subr.mxu0 0.0
    %151 = vmatpush1.msra.mxu0 0.0
    %152 = vmatprep.subr.mxu0 0.0
    %153 = vmatpush1.msra.mxu0 0.0
    %154 = vmatprep.subr.mxu0 0.0
    %155 = vmatpush1.msra.mxu0 0.0
    %156 = vmatprep.subr.mxu0 0.0
    %157 = vmatpush1.msra.mxu0 0.0
    %158 = vmatprep.subr.mxu0 0.0
    %159 = vmatpush1.msra.mxu0 0.0
    %160 = vmatprep.subr.mxu0 0.0
    %161 = vmatpush1.msra.mxu0 0.0
    %162 = vmatprep.subr.mxu0 0.0
    %163 = vmatpush1.msra.mxu0 0.0
    %164 = vmatprep.subr.mxu0 0.0
    %165 = vmatpush1.msra.mxu0 0.0
    %166 = vmatprep.subr.mxu0 0.0
    %167 = vmatpush1.msra.mxu0 0.0
    %168 = vmatprep.subr.mxu0 0.0
    %169 = vmatpush1.msra.mxu0 0.0
    %170 = vmatprep.subr.mxu0 0.0
    %171 = vmatpush1.msra.mxu0 0.0
    %172 = vmatprep.subr.mxu0 0.0
    %173 = vmatpush1.msra.mxu0 0.0
    %174 = vmatprep.subr.mxu0 0.0
    %175 = vmatpush1.msra.mxu0 0.0
    %176 = vmatprep.subr.mxu0 0.0
    %177 = vmatpush1.msra.mxu0 0.0
    %178 = vmatprep.subr.mxu0 0.0
    %179 = vmatpush1.msra.mxu0 0.0
    %180 = vmatprep.subr.mxu0 0.0
    %181 = vmatpush1.msra.mxu0 0.0
    %182 = vmatprep.subr.mxu0 0.0
    %183 = vmatpush1.msra.mxu0 0.0
    %184 = vmatprep.subr.mxu0 0.0
    %185 = vmatpush1.msra.mxu0 0.0
    %186 = vmatprep.mubr.f32.mxu0 0.0
    %187 = vmatmul.mubr.f32.gmra.mrb[0].mxu0 %v120
    %v188 = vpop.f32.mrb[0].mxu0
    %v189 = vadd.f32 %v111, %v188
    %v190 = vpop.f32.mrb[0].mxu0
    %v191 = vadd.f32 %v115, %v190
    %192 = vdwg.mxu0
    %vm193 = vcmask 64512
    %v195 = vsel %vm193, %v61, 0
    %197 = vmatprep.subr.mxu0 0.0
    %198 = vmatpush1.msra.mxu0 0.0
    %199 = vmatprep.subr.mxu0 0.0
    %200 = vmatpush1.msra.mxu0 0.0
    %201 = vmatprep.subr.mxu0 0.0
    %202 = vmatpush1.msra.mxu0 0.0
    %203 = vmatprep.subr.mxu0 0.0
    %204 = vmatpush1.msra.mxu0 0.0
    %205 = vmatprep.subr.mxu0 0.0
    %206 = vmatpush1.msra.mxu0 0.0
    %207 = vmatprep.subr.mxu0 0.0
    %208 = vmatpush1.msra.mxu0 0.0
    %209 = vmatprep.subr.mxu0 0.0
    %210 = vmatpush1.msra.mxu0 0.0
    %211 = vmatprep.subr.mxu0 0.0
    %212 = vmatpush1.msra.mxu0 0.0
    %213 = vmatprep.subr.mxu0 0.0
    %214 = vmatpush1.msra.mxu0 0.0
    %215 = vmatprep.subr.mxu0 0.0
    %216 = vmatpush1.msra.mxu0 0.0
    %217 = vmatprep.subr.mxu0 0.0
    %218 = vmatpush1.msra.mxu0 0.0
    %219 = vmatprep.subr.mxu0 0.0
    %220 = vmatpush1.msra.mxu0 0.0
    %221 = vmatprep.subr.mxu0 0.0
    %222 = vmatpush1.msra.mxu0 0.0
    %223 = vmatprep.subr.mxu0 0.0
    %224 = vmatpush1.msra.mxu0 0.0
    %225 = vmatprep.subr.mxu0 0.0
    %226 = vmatpush1.msra.mxu0 0.0
    %227 = vmatprep.subr.mxu0 0.0
    %228 = vmatpush1.msra.mxu0 0.0
    %229 = vmatprep.subr.mxu0 0.0
    %230 = vmatpush1.msra.mxu0 0.0
    %231 = vmatprep.subr.mxu0 0.0
    %232 = vmatpush1.msra.mxu0 0.0
    %233 = vmatprep.subr.mxu0 0.0
    %234 = vmatpush1.msra.mxu0 0.0
    %235 = vmatprep.subr.mxu0 0.0
    %236 = vmatpush1.msra.mxu0 0.0
    %237 = vmatprep.subr.mxu0 0.0
    %238 = vmatpush1.msra.mxu0 0.0
    %239 = vmatprep.subr.mxu0 0.0
    %240 = vmatpush1.msra.mxu0 0.0
    %241 = vmatprep.subr.mxu0 0.0
    %242 = vmatpush1.msra.mxu0 0.0
    %243 = vmatprep.subr.mxu0 0.0
    %244 = vmatpush1.msra.mxu0 0.0
    %245 = vmatprep.subr.mxu0 0.0
    %246 = vmatpush1.msra.mxu0 0.0
    %247 = vmatprep.subr.mxu0 0.0
    %248 = vmatpush1.msra.mxu0 0.0
    %249 = vmatprep.subr.mxu0 0.0
    %250 = vmatpush1.msra.mxu0 0.0
    %251 = vmatprep.subr.mxu0 0.0
    %252 = vmatpush1.msra.mxu0 0.0
    %253 = vmatprep.subr.mxu0 0.0
    %254 = vmatpush1.msra.mxu0 0.0
    %255 = vmatprep.subr.mxu0 0.0
    %256 = vmatpush1.msra.mxu0 0.0
    %257 = vmatprep.subr.mxu0 0.0
    %258 = vmatpush1.msra.mxu0 0.0
    %259 = vmatprep.subr.mxu0 0.0
    %260 = vmatpush1.msra.mxu0 0.0
    %261 = vmatprep.mubr.f32.mxu0 0.0
    %262 = vmatmul.mubr.f32.gmra.mrb[0].mxu0 %v195
    %v263 = vpop.f32.mrb[0].mxu0
    %v264 = vadd.f32 0.0, %v263
    %v265 = vpop.f32.mrb[0].mxu0
    %266 = vdwg.mxu0
    %v268 = vsel %vm193, %v64, 0
    %270 = vmatprep.subr.mxu0 0.0
    %271 = vmatpush1.msra.mxu0 0.0
    %272 = vmatprep.subr.mxu0 0.0
    %273 = vmatpush1.msra.mxu0 0.0
    %274 = vmatprep.subr.mxu0 0.0
    %275 = vmatpush1.msra.mxu0 0.0
    %276 = vmatprep.subr.mxu0 0.0
    %277 = vmatpush1.msra.mxu0 0.0
    %278 = vmatprep.subr.mxu0 0.0
    %279 = vmatpush1.msra.mxu0 0.0
    %280 = vmatprep.subr.mxu0 0.0
    %281 = vmatpush1.msra.mxu0 0.0
    %282 = vmatprep.subr.mxu0 0.0
    %283 = vmatpush1.msra.mxu0 0.0
    %284 = vmatprep.subr.mxu0 0.0
    %285 = vmatpush1.msra.mxu0 0.0
    %286 = vmatprep.subr.mxu0 0.0
    %287 = vmatpush1.msra.mxu0 0.0
    %288 = vmatprep.subr.mxu0 0.0
    %289 = vmatpush1.msra.mxu0 0.0
    %290 = vmatprep.subr.mxu0 0.0
    %291 = vmatpush1.msra.mxu0 0.0
    %292 = vmatprep.subr.mxu0 0.0
    %293 = vmatpush1.msra.mxu0 0.0
    %294 = vmatprep.subr.mxu0 0.0
    %295 = vmatpush1.msra.mxu0 0.0
    %296 = vmatprep.subr.mxu0 0.0
    %297 = vmatpush1.msra.mxu0 0.0
    %298 = vmatprep.subr.mxu0 0.0
    %299 = vmatpush1.msra.mxu0 0.0
    %300 = vmatprep.subr.mxu0 0.0
    %301 = vmatpush1.msra.mxu0 0.0
    %302 = vmatprep.subr.mxu0 0.0
    %303 = vmatpush1.msra.mxu0 0.0
    %304 = vmatprep.subr.mxu0 0.0
    %305 = vmatpush1.msra.mxu0 0.0
    %306 = vmatprep.subr.mxu0 0.0
    %307 = vmatpush1.msra.mxu0 0.0
    %308 = vmatprep.subr.mxu0 0.0
    %309 = vmatpush1.msra.mxu0 0.0
    %310 = vmatprep.subr.mxu0 0.0
    %311 = vmatpush1.msra.mxu0 0.0
    %312 = vmatprep.subr.mxu0 0.0
    %313 = vmatpush1.msra.mxu0 0.0
    %314 = vmatprep.subr.mxu0 0.0
    %315 = vmatpush1.msra.mxu0 0.0
    %316 = vmatprep.subr.mxu0 0.0
    %317 = vmatpush1.msra.mxu0 0.0
    %318 = vmatprep.subr.mxu0 0.0
    %319 = vmatpush1.msra.mxu0 0.0
    %320 = vmatprep.subr.mxu0 0.0
    %321 = vmatpush1.msra.mxu0 0.0
    %322 = vmatprep.subr.mxu0 0.0
    %323 = vmatpush1.msra.mxu0 0.0
    %324 = vmatprep.subr.mxu0 0.0
    %325 = vmatpush1.msra.mxu0 0.0
    %326 = vmatprep.subr.mxu0 0.0
    %327 = vmatpush1.msra.mxu0 0.0
    %328 = vmatprep.subr.mxu0 0.0
    %329 = vmatpush1.msra.mxu0 0.0
    %330 = vmatprep.subr.mxu0 0.0
    %331 = vmatpush1.msra.mxu0 0.0
    %332 = vmatprep.subr.mxu0 0.0
    %333 = vmatpush1.msra.mxu0 0.0
    %334 = vmatprep.mubr.f32.mxu0 0.0
    %335 = vmatmul.mubr.f32.gmra.mrb[0].mxu0 %v268
    %v336 = vpop.f32.mrb[0].mxu0
    %v337 = vadd.f32 0.0, %v336
    %v338 = vpop.f32.mrb[0].mxu0
    %339 = vdwg.mxu0
    %341 = vrot.lane.b32.xlu0 %v337, 64
    %v342 = vpop.permute.xlu0 %341
    %vm344 = vcmask 523264
    %v345 = vsel %vm344, %v264, %v342
    %346 = vmatprep.subr.mxu0 %v67
    %347 = vmatpush1.msra.mxu0 %v66
    %348 = vmatprep.subr.mxu0 %v69
    %349 = vmatpush1.msra.mxu0 %v68
    %350 = vmatprep.subr.mxu0 %v71
    %351 = vmatpush1.msra.mxu0 %v70
    %352 = vmatprep.subr.mxu0 %v73
    %353 = vmatpush1.msra.mxu0 %v72
    %354 = vmatprep.subr.mxu0 %v75
    %355 = vmatpush1.msra.mxu0 %v74
    %356 = vmatprep.subr.mxu0 %v77
    %357 = vmatpush1.msra.mxu0 %v76
    %358 = vmatprep.subr.mxu0 %v79
    %359 = vmatpush1.msra.mxu0 %v78
    %360 = vmatprep.subr.mxu0 %v81
    %361 = vmatpush1.msra.mxu0 %v80
    %362 = vmatprep.subr.mxu0 %v83
    %363 = vmatpush1.msra.mxu0 %v82
    %364 = vmatprep.subr.mxu0 %v85
    %365 = vmatpush1.msra.mxu0 %v84
    %366 = vmatprep.subr.mxu0 %v87
    %367 = vmatpush1.msra.mxu0 %v86
    %368 = vmatprep.subr.mxu0 %v89
    %369 = vmatpush1.msra.mxu0 %v88
    %370 = vmatprep.subr.mxu0 %v91
    %371 = vmatpush1.msra.mxu0 %v90
    %372 = vmatprep.subr.mxu0 %v93
    %373 = vmatpush1.msra.mxu0 %v92
    %374 = vmatprep.subr.mxu0 %v95
    %375 = vmatpush1.msra.mxu0 %v94
    %376 = vmatprep.subr.mxu0 %v97
    %377 = vmatpush1.msra.mxu0 %v96
    %378 = vmatprep.subr.mxu0 0.0
    %379 = vmatpush1.msra.mxu0 0.0
    %380 = vmatprep.subr.mxu0 0.0
    %381 = vmatpush1.msra.mxu0 0.0
    %382 = vmatprep.subr.mxu0 0.0
    %383 = vmatpush1.msra.mxu0 0.0
    %384 = vmatprep.subr.mxu0 0.0
    %385 = vmatpush1.msra.mxu0 0.0
    %386 = vmatprep.subr.mxu0 0.0
    %387 = vmatpush1.msra.mxu0 0.0
    %388 = vmatprep.subr.mxu0 0.0
    %389 = vmatpush1.msra.mxu0 0.0
    %390 = vmatprep.subr.mxu0 0.0
    %391 = vmatpush1.msra.mxu0 0.0
    %392 = vmatprep.subr.mxu0 0.0
    %393 = vmatpush1.msra.mxu0 0.0
    %394 = vmatprep.subr.mxu0 0.0
    %395 = vmatpush1.msra.mxu0 0.0
    %396 = vmatprep.subr.mxu0 0.0
    %397 = vmatpush1.msra.mxu0 0.0
    %398 = vmatprep.subr.mxu0 0.0
    %399 = vmatpush1.msra.mxu0 0.0
    %400 = vmatprep.subr.mxu0 0.0
    %401 = vmatpush1.msra.mxu0 0.0
    %402 = vmatprep.subr.mxu0 0.0
    %403 = vmatpush1.msra.mxu0 0.0
    %404 = vmatprep.subr.mxu0 0.0
    %405 = vmatpush1.msra.mxu0 0.0
    %406 = vmatprep.subr.mxu0 0.0
    %407 = vmatpush1.msra.mxu0 0.0
    %408 = vmatprep.subr.mxu0 0.0
    %409 = vmatpush1.msra.mxu0 0.0
    %410 = vmatprep.mubr.f32.mxu0 0.0
    %411 = vmatmul.mubr.f32.gmra.mrb[0].mxu0 %v345
    %v412 = vpop.f32.mrb[0].mxu0
    %v413 = vadd.f32 0.0, %v412
    %v414 = vpop.f32.mrb[0].mxu0
    %v415 = vadd.f32 0.0, %v414
    %416 = vdwg.mxu0
    %v417 = vadd.f32 %v189, %v413
    %v418 = vadd.f32 %v191, %v415
    %v419 = vxor.u32 %v417, 2147483648
    %v420 = vxor.u32 %v418, 2147483648
    %v421 = vmul.f32 %v419, 1.442695
    %v422 = vpow.pop %v421
    %v423 = vmul.f32 %v420, 1.442695
    %v424 = vpow.pop %v423
    %v425 = vadd.f32 %v422, 1.0
    %v426 = vadd.f32 %v424, 1.0
    %v427 = vrcp.pop %v425
    %v428 = vmul.f32 1.0, %v427
    %v429 = vrcp.pop %v426
    %v430 = vmul.f32 1.0, %v429
    %v431 = vtanh.pop %v418
    %433 = vrot.lane.b32.xlu0 %v431, 64
    %v434 = vpop.permute.xlu0 %433
    %v436 = vmul.f32 %v428, %v434
    %438 = vrot.lane.b32.xlu0 %v345, 32
    %v439 = vpop.permute.xlu0 %438
    %v441 = vmul.f32 %v428, %v439
    %443 = vrot.lane.b32.xlu0 %v441, 64
    %v444 = vpop.permute.xlu0 %443
    %v446 = vadd.f32 %v436, %v444
    %v447 = vmul.f32 %v428, %v431
    %448 = vrot.lane.b32.xlu0 %v345, 64
    %v449 = vpop.permute.xlu0 %448
    %v451 = vmul.f32 %v430, %v449
    %453 = vrot.lane.b32.xlu0 %v451, 64
    %v454 = vpop.permute.xlu0 %453
    %v456 = vadd.f32 %v447, %v454
    %458 = vrot.lane.b32.xlu0 %v456, 64
    %v459 = vpop.permute.xlu0 %458
    %v461 = vsel %vm118, %v446, %v459
    %v462 = vtanh.pop %v461
    %464 = vrot.lane.b32.xlu0 %v462, 32
    %v465 = vpop.permute.xlu0 %464
    %v467 = vmul.f32 %v428, %v465
    %468 = vrot.lane.b32.xlu0 %v462, 96
    %v469 = vpop.permute.xlu0 %468
    %v471 = vmul.f32 %v430, %v469
    %vm472 = vcmp.eq.s32.totalorder %v65, 0
    %474 = vrot.lane.b32.xlu0 %v467, 96
    %v475 = vpop.permute.xlu0 %474
    %478 = vrot.lane.b32.xlu0 %v446, 32
    %v479 = vpop.permute.xlu0 %478
    %v481 = vsel %vm118, %v475, %v479
    %v482 = vsel %vm472, 1, 0
    %483 = vset.pattern.permute.xlu0 0
    %484 = vperm.xlu0 %483, %v482
    %v485 = vpop.permute.xlu0 %484
    %vm486 = vcmp.eq.s32.totalorder %v485, 1
    %v487 = vsel %vm486, %v481, 0.0
    %v488 = vsel %vm118, %v471, %v459
    %489 = vset.pattern.permute.xlu0 1
    %490 = vperm.xlu0 %489, %v482
    %v491 = vpop.permute.xlu0 %490
    %vm492 = vcmp.eq.s32.totalorder %v491, 1
    %v493 = vsel %vm492, %v488, 0.0
    %495 = vrot.lane.b32.xlu0 %v493, 64
    %v496 = vpop.permute.xlu0 %495
    %v498 = vsel %vm344, %v487, %v496
    %499 = vmatprep.subr.mxu0 0.0
    %500 = vmatpush1.msra.mxu0 %v498
    %501 = vmatprep.subr.mxu0 0.0
    %502 = vmatpush1.msra.mxu0 0.0
    %503 = vmatprep.subr.mxu0 0.0
    %504 = vmatpush1.msra.mxu0 0.0
    %505 = vmatprep.subr.mxu0 0.0
    %506 = vmatpush1.msra.mxu0 0.0
    %507 = vmatprep.subr.mxu0 0.0
    %508 = vmatpush1.msra.mxu0 0.0
    %509 = vmatprep.subr.mxu0 0.0
    %510 = vmatpush1.msra.mxu0 0.0
    %511 = vmatprep.subr.mxu0 0.0
    %512 = vmatpush1.msra.mxu0 0.0
    %513 = vmatprep.subr.mxu0 0.0
    %514 = vmatpush1.msra.mxu0 0.0
    %515 = vmatprep.subr.mxu0 0.0
    %516 = vmatpush1.msra.mxu0 0.0
    %517 = vmatprep.subr.mxu0 0.0
    %518 = vmatpush1.msra.mxu0 0.0
    %519 = vmatprep.subr.mxu0 0.0
    %520 = vmatpush1.msra.mxu0 0.0
    %521 = vmatprep.subr.mxu0 0.0
    %522 = vmatpush1.msra.mxu0 0.0
    %523 = vmatprep.subr.mxu0 0.0
    %524 = vmatpush1.msra.mxu0 0.0
    %525 = vmatprep.subr.mxu0 0.0
    %526 = vmatpush1.msra.mxu0 0.0
    %527 = vmatprep.subr.mxu0 0.0
    %528 = vmatpush1.msra.mxu0 0.0
    %529 = vmatprep.subr.mxu0 0.0
    %530 = vmatpush1.msra.mxu0 0.0
    %531 = vmatprep.subr.mxu0 0.0
    %532 = vmatpush1.msra.mxu0 0.0
    %533 = vmatprep.subr.mxu0 0.0
    %534 = vmatpush1.msra.mxu0 0.0
    %535 = vmatprep.subr.mxu0 0.0
    %536 = vmatpush1.msra.mxu0 0.0
    %537 = vmatprep.subr.mxu0 0.0
    %538 = vmatpush1.msra.mxu0 0.0
    %539 = vmatprep.subr.mxu0 0.0
    %540 = vmatpush1.msra.mxu0 0.0
    %541 = vmatprep.subr.mxu0 0.0
    %542 = vmatpush1.msra.mxu0 0.0
    %543 = vmatprep.subr.mxu0 0.0
    %544 = vmatpush1.msra.mxu0 0.0
    %545 = vmatprep.subr.mxu0 0.0
    %546 = vmatpush1.msra.mxu0 0.0
    %547 = vmatprep.subr.mxu0 0.0
    %548 = vmatpush1.msra.mxu0 0.0
    %549 = vmatprep.subr.mxu0 0.0
    %550 = vmatpush1.msra.mxu0 0.0
    %551 = vmatprep.subr.mxu0 0.0
    %552 = vmatpush1.msra.mxu0 0.0
    %553 = vmatprep.subr.mxu0 0.0
    %554 = vmatpush1.msra.mxu0 0.0
    %555 = vmatprep.subr.mxu0 0.0
    %556 = vmatpush1.msra.mxu0 0.0
    %557 = vmatprep.subr.mxu0 0.0
    %558 = vmatpush1.msra.mxu0 0.0
    %559 = vmatprep.subr.mxu0 0.0
    %560 = vmatpush1.msra.mxu0 0.0
    %561 = vmatprep.subr.mxu0 0.0
    %562 = vmatpush1.msra.mxu0 0.0
    %563 = vmatprep.mubr.f32.mxu0 0.0
    %564 = vmatmul.mubr.f32.gmra.mrb[0].mxu0 %v195
    %v565 = vpop.f32.mrb[0].mxu0
    %v566 = vadd.f32 0.0, %v565
    %v567 = vpop.f32.mrb[0].mxu0
    %568 = vdwg.mxu0
    %570 = vrot.lane.b32.xlu0 %v498, 64
    %v571 = vpop.permute.xlu0 %570
    %573 = vmatprep.subr.mxu0 0.0
    %574 = vmatpush1.msra.mxu0 %v571
    %575 = vmatprep.subr.mxu0 0.0
    %576 = vmatpush1.msra.mxu0 0.0
    %577 = vmatprep.subr.mxu0 0.0
    %578 = vmatpush1.msra.mxu0 0.0
    %579 = vmatprep.subr.mxu0 0.0
    %580 = vmatpush1.msra.mxu0 0.0
    %581 = vmatprep.subr.mxu0 0.0
    %582 = vmatpush1.msra.mxu0 0.0
    %583 = vmatprep.subr.mxu0 0.0
    %584 = vmatpush1.msra.mxu0 0.0
    %585 = vmatprep.subr.mxu0 0.0
    %586 = vmatpush1.msra.mxu0 0.0
    %587 = vmatprep.subr.mxu0 0.0
    %588 = vmatpush1.msra.mxu0 0.0
    %589 = vmatprep.subr.mxu0 0.0
    %590 = vmatpush1.msra.mxu0 0.0
    %591 = vmatprep.subr.mxu0 0.0
    %592 = vmatpush1.msra.mxu0 0.0
    %593 = vmatprep.subr.mxu0 0.0
    %594 = vmatpush1.msra.mxu0 0.0
    %595 = vmatprep.subr.mxu0 0.0
    %596 = vmatpush1.msra.mxu0 0.0
    %597 = vmatprep.subr.mxu0 0.0
    %598 = vmatpush1.msra.mxu0 0.0
    %599 = vmatprep.subr.mxu0 0.0
    %600 = vmatpush1.msra.mxu0 0.0
    %601 = vmatprep.subr.mxu0 0.0
    %602 = vmatpush1.msra.mxu0 0.0
    %603 = vmatprep.subr.mxu0 0.0
    %604 = vmatpush1.msra.mxu0 0.0
    %605 = vmatprep.subr.mxu0 0.0
    %606 = vmatpush1.msra.mxu0 0.0
    %607 = vmatprep.subr.mxu0 0.0
    %608 = vmatpush1.msra.mxu0 0.0
    %609 = vmatprep.subr.mxu0 0.0
    %610 = vmatpush1.msra.mxu0 0.0
    %611 = vmatprep.subr.mxu0 0.0
    %612 = vmatpush1.msra.mxu0 0.0
    %613 = vmatprep.subr.mxu0 0.0
    %614 = vmatpush1.msra.mxu0 0.0
    %615 = vmatprep.subr.mxu0 0.0
    %616 = vmatpush1.msra.mxu0 0.0
    %617 = vmatprep.subr.mxu0 0.0
    %618 = vmatpush1.msra.mxu0 0.0
    %619 = vmatprep.subr.mxu0 0.0
    %620 = vmatpush1.msra.mxu0 0.0
    %621 = vmatprep.subr.mxu0 0.0
    %622 = vmatpush1.msra.mxu0 0.0
    %623 = vmatprep.subr.mxu0 0.0
    %624 = vmatpush1.msra.mxu0 0.0
    %625 = vmatprep.subr.mxu0 0.0
    %626 = vmatpush1.msra.mxu0 0.0
    %627 = vmatprep.subr.mxu0 0.0
    %628 = vmatpush1.msra.mxu0 0.0
    %629 = vmatprep.subr.mxu0 0.0
    %630 = vmatpush1.msra.mxu0 0.0
    %631 = vmatprep.subr.mxu0 0.0
    %632 = vmatpush1.msra.mxu0 0.0
    %633 = vmatprep.subr.mxu0 0.0
    %634 = vmatpush1.msra.mxu0 0.0
    %635 = vmatprep.subr.mxu0 0.0
    %636 = vmatpush1.msra.mxu0 0.0
    %637 = vmatprep.mubr.f32.mxu0 0.0
    %638 = vmatmul.mubr.f32.gmra.mrb[0].mxu0 %v268
    %v639 = vpop.f32.mrb[0].mxu0
    %v640 = vadd.f32 0.0, %v639
    %v641 = vpop.f32.mrb[0].mxu0
    %642 = vdwg.mxu0
    %644 = vrot.lane.b32.xlu0 %v640, 64
    %v645 = vpop.permute.xlu0 %644
    %v647 = vsel %vm344, %v566, %v645
    %648 = vmatprep.subr.mxu0 %v67
    %649 = vmatpush1.msra.mxu0 %v66
    %650 = vmatprep.subr.mxu0 %v69
    %651 = vmatpush1.msra.mxu0 %v68
    %652 = vmatprep.subr.mxu0 %v71
    %653 = vmatpush1.msra.mxu0 %v70
    %654 = vmatprep.subr.mxu0 %v73
    %655 = vmatpush1.msra.mxu0 %v72
    %656 = vmatprep.subr.mxu0 %v75
    %657 = vmatpush1.msra.mxu0 %v74
    %658 = vmatprep.subr.mxu0 %v77
    %659 = vmatpush1.msra.mxu0 %v76
    %660 = vmatprep.subr.mxu0 %v79
    %661 = vmatpush1.msra.mxu0 %v78
    %662 = vmatprep.subr.mxu0 %v81
    %663 = vmatpush1.msra.mxu0 %v80
    %664 = vmatprep.subr.mxu0 %v83
    %665 = vmatpush1.msra.mxu0 %v82
    %666 = vmatprep.subr.mxu0 %v85
    %667 = vmatpush1.msra.mxu0 %v84
    %668 = vmatprep.subr.mxu0 %v87
    %669 = vmatpush1.msra.mxu0 %v86
    %670 = vmatprep.subr.mxu0 %v89
    %671 = vmatpush1.msra.mxu0 %v88
    %672 = vmatprep.subr.mxu0 %v91
    %673 = vmatpush1.msra.mxu0 %v90
    %674 = vmatprep.subr.mxu0 %v93
    %675 = vmatpush1.msra.mxu0 %v92
    %676 = vmatprep.subr.mxu0 %v95
    %677 = vmatpush1.msra.mxu0 %v94
    %678 = vmatprep.subr.mxu0 %v97
    %679 = vmatpush1.msra.mxu0 %v96
    %680 = vmatprep.subr.mxu0 0.0
    %681 = vmatpush1.msra.mxu0 0.0
    %682 = vmatprep.subr.mxu0 0.0
    %683 = vmatpush1.msra.mxu0 0.0
    %684 = vmatprep.subr.mxu0 0.0
    %685 = vmatpush1.msra.mxu0 0.0
    %686 = vmatprep.subr.mxu0 0.0
    %687 = vmatpush1.msra.mxu0 0.0
    %688 = vmatprep.subr.mxu0 0.0
    %689 = vmatpush1.msra.mxu0 0.0
    %690 = vmatprep.subr.mxu0 0.0
    %691 = vmatpush1.msra.mxu0 0.0
    %692 = vmatprep.subr.mxu0 0.0
    %693 = vmatpush1.msra.mxu0 0.0
    %694 = vmatprep.subr.mxu0 0.0
    %695 = vmatpush1.msra.mxu0 0.0
    %696 = vmatprep.subr.mxu0 0.0
    %697 = vmatpush1.msra.mxu0 0.0
    %698 = vmatprep.subr.mxu0 0.0
    %699 = vmatpush1.msra.mxu0 0.0
    %700 = vmatprep.subr.mxu0 0.0
    %701 = vmatpush1.msra.mxu0 0.0
    %702 = vmatprep.subr.mxu0 0.0
    %703 = vmatpush1.msra.mxu0 0.0
    %704 = vmatprep.subr.mxu0 0.0
    %705 = vmatpush1.msra.mxu0 0.0
    %706 = vmatprep.subr.mxu0 0.0
    %707 = vmatpush1.msra.mxu0 0.0
    %708 = vmatprep.subr.mxu0 0.0
    %709 = vmatpush1.msra.mxu0 0.0
    %710 = vmatprep.subr.mxu0 0.0
    %711 = vmatpush1.msra.mxu0 0.0
    %712 = vmatprep.mubr.f32.mxu0 0.0
    %713 = vmatmul.mubr.f32.gmra.mrb[0].mxu0 %v647
    %v714 = vpop.f32.mrb[0].mxu0
    %v715 = vadd.f32 0.0, %v714
    %v716 = vpop.f32.mrb[0].mxu0
    %v717 = vadd.f32 0.0, %v716
    %718 = vdwg.mxu0
    %v719 = vadd.f32 %v189, %v715
    %v720 = vadd.f32 %v191, %v717
    %v721 = vxor.u32 %v719, 2147483648
    %v722 = vxor.u32 %v720, 2147483648
    %v723 = vmul.f32 %v721, 1.442695
    %v724 = vpow.pop %v723
    %v725 = vmul.f32 %v722, 1.442695
    %v726 = vpow.pop %v725
    %v727 = vadd.f32 %v724, 1.0
    %v728 = vadd.f32 %v726, 1.0
    %v729 = vrcp.pop %v727
    %v730 = vmul.f32 1.0, %v729
    %v731 = vrcp.pop %v728
    %v732 = vmul.f32 1.0, %v731
    %v733 = vtanh.pop %v720
    %735 = vrot.lane.b32.xlu0 %v733, 64
    %v736 = vpop.permute.xlu0 %735
    %v738 = vmul.f32 %v730, %v736
    %740 = vrot.lane.b32.xlu0 %v647, 32
    %v741 = vpop.permute.xlu0 %740
    %v743 = vmul.f32 %v730, %v741
    %745 = vrot.lane.b32.xlu0 %v743, 64
    %v746 = vpop.permute.xlu0 %745
    %v748 = vadd.f32 %v738, %v746
    %v749 = vmul.f32 %v730, %v733
    %750 = vrot.lane.b32.xlu0 %v647, 64
    %v751 = vpop.permute.xlu0 %750
    %v753 = vmul.f32 %v732, %v751
    %755 = vrot.lane.b32.xlu0 %v753, 64
    %v756 = vpop.permute.xlu0 %755
    %v758 = vadd.f32 %v749, %v756
    %760 = vrot.lane.b32.xlu0 %v758, 64
    %v761 = vpop.permute.xlu0 %760
    %v763 = vsel %vm118, %v748, %v761
    %v764 = vtanh.pop %v763
    %766 = vrot.lane.b32.xlu0 %v764, 32
    %v767 = vpop.permute.xlu0 %766
    %v769 = vmul.f32 %v730, %v767
    %770 = vrot.lane.b32.xlu0 %v764, 96
    %v771 = vpop.permute.xlu0 %770
    %v773 = vmul.f32 %v732, %v771
    %vm774 = vcmp.eq.s32.totalorder %v65, 1
    %776 = vrot.lane.b32.xlu0 %v769, 96
    %v777 = vpop.permute.xlu0 %776
    %780 = vrot.lane.b32.xlu0 %v748, 32
    %v781 = vpop.permute.xlu0 %780
    %v783 = vsel %vm118, %v777, %v781
    %v784 = vsel %vm774, 1, 0
    %785 = vset.pattern.permute.xlu0 0
    %786 = vperm.xlu0 %785, %v784
    %v787 = vpop.permute.xlu0 %786
    %vm788 = vcmp.eq.s32.totalorder %v787, 1
    %v789 = vsel %vm788, %v783, %v498
    %v790 = vsel %vm118, %v773, %v761
    %791 = vset.pattern.permute.xlu0 1
    %792 = vperm.xlu0 %791, %v784
    %v793 = vpop.permute.xlu0 %792
    %vm794 = vcmp.eq.s32.totalorder %v793, 1
    %v795 = vsel %vm794, %v790, %v571
    %797 = vrot.lane.b32.xlu0 %v795, 64
    %v798 = vpop.permute.xlu0 %797
    %v800 = vsel %vm344, %v789, %v798
    %801 = vmatprep.subr.mxu0 0.0
    %802 = vmatpush1.msra.mxu0 %v800
    %803 = vmatprep.subr.mxu0 0.0
    %804 = vmatpush1.msra.mxu0 0.0
    %805 = vmatprep.subr.mxu0 0.0
    %806 = vmatpush1.msra.mxu0 0.0
    %807 = vmatprep.subr.mxu0 0.0
    %808 = vmatpush1.msra.mxu0 0.0
    %809 = vmatprep.subr.mxu0 0.0
    %810 = vmatpush1.msra.mxu0 0.0
    %811 = vmatprep.subr.mxu0 0.0
    %812 = vmatpush1.msra.mxu0 0.0
    %813 = vmatprep.subr.mxu0 0.0
    %814 = vmatpush1.msra.mxu0 0.0
    %815 = vmatprep.subr.mxu0 0.0
    %816 = vmatpush1.msra.mxu0 0.0
    %817 = vmatprep.subr.mxu0 0.0
    %818 = vmatpush1.msra.mxu0 0.0
    %819 = vmatprep.subr.mxu0 0.0
    %820 = vmatpush1.msra.mxu0 0.0
    %821 = vmatprep.subr.mxu0 0.0
    %822 = vmatpush1.msra.mxu0 0.0
    %823 = vmatprep.subr.mxu0 0.0
    %824 = vmatpush1.msra.mxu0 0.0
    %825 = vmatprep.subr.mxu0 0.0
    %826 = vmatpush1.msra.mxu0 0.0
    %827 = vmatprep.subr.mxu0 0.0
    %828 = vmatpush1.msra.mxu0 0.0
    %829 = vmatprep.subr.mxu0 0.0
    %830 = vmatpush1.msra.mxu0 0.0
    %831 = vmatprep.subr.mxu0 0.0
    %832 = vmatpush1.msra.mxu0 0.0
    %833 = vmatprep.subr.mxu0 0.0
    %834 = vmatpush1.msra.mxu0 0.0
    %835 = vmatprep.subr.mxu0 0.0
    %836 = vmatpush1.msra.mxu0 0.0
    %837 = vmatprep.subr.mxu0 0.0
    %838 = vmatpush1.msra.mxu0 0.0
    %839 = vmatprep.subr.mxu0 0.0
    %840 = vmatpush1.msra.mxu0 0.0
    %841 = vmatprep.subr.mxu0 0.0
    %842 = vmatpush1.msra.mxu0 0.0
    %843 = vmatprep.subr.mxu0 0.0
    %844 = vmatpush1.msra.mxu0 0.0
    %845 = vmatprep.subr.mxu0 0.0
    %846 = vmatpush1.msra.mxu0 0.0
    %847 = vmatprep.subr.mxu0 0.0
    %848 = vmatpush1.msra.mxu0 0.0
    %849 = vmatprep.subr.mxu0 0.0
    %850 = vmatpush1.msra.mxu0 0.0
    %851 = vmatprep.subr.mxu0 0.0
    %852 = vmatpush1.msra.mxu0 0.0
    %853 = vmatprep.subr.mxu0 0.0
    %854 = vmatpush1.msra.mxu0 0.0
    %855 = vmatprep.subr.mxu0 0.0
    %856 = vmatpush1.msra.mxu0 0.0
    %857 = vmatprep.subr.mxu0 0.0
    %858 = vmatpush1.msra.mxu0 0.0
    %859 = vmatprep.subr.mxu0 0.0
    %860 = vmatpush1.msra.mxu0 0.0
    %861 = vmatprep.subr.mxu0 0.0
    %862 = vmatpush1.msra.mxu0 0.0
    %863 = vmatprep.subr.mxu0 0.0
    %864 = vmatpush1.msra.mxu0 0.0
    %865 = vmatprep.mubr.f32.mxu0 0.0
    %866 = vmatmul.mubr.f32.gmra.mrb[0].mxu0 %v195
    %v867 = vpop.f32.mrb[0].mxu0
    %v868 = vadd.f32 0.0, %v867
    %v869 = vpop.f32.mrb[0].mxu0
    %870 = vdwg.mxu0
    %872 = vrot.lane.b32.xlu0 %v800, 64
    %v873 = vpop.permute.xlu0 %872
    %875 = vmatprep.subr.mxu0 0.0
    %876 = vmatpush1.msra.mxu0 %v873
    %877 = vmatprep.subr.mxu0 0.0
    %878 = vmatpush1.msra.mxu0 0.0
    %879 = vmatprep.subr.mxu0 0.0
    %880 = vmatpush1.msra.mxu0 0.0
    %881 = vmatprep.subr.mxu0 0.0
    %882 = vmatpush1.msra.mxu0 0.0
    %883 = vmatprep.subr.mxu0 0.0
    %884 = vmatpush1.msra.mxu0 0.0
    %885 = vmatprep.subr.mxu0 0.0
    %886 = vmatpush1.msra.mxu0 0.0
    %887 = vmatprep.subr.mxu0 0.0
    %888 = vmatpush1.msra.mxu0 0.0
    %889 = vmatprep.subr.mxu0 0.0
    %890 = vmatpush1.msra.mxu0 0.0
    %891 = vmatprep.subr.mxu0 0.0
    %892 = vmatpush1.msra.mxu0 0.0
    %893 = vmatprep.subr.mxu0 0.0
    %894 = vmatpush1.msra.mxu0 0.0
    %895 = vmatprep.subr.mxu0 0.0
    %896 = vmatpush1.msra.mxu0 0.0
    %897 = vmatprep.subr.mxu0 0.0
    %898 = vmatpush1.msra.mxu0 0.0
    %899 = vmatprep.subr.mxu0 0.0
    %900 = vmatpush1.msra.mxu0 0.0
    %901 = vmatprep.subr.mxu0 0.0
    %902 = vmatpush1.msra.mxu0 0.0
    %903 = vmatprep.subr.mxu0 0.0
    %904 = vmatpush1.msra.mxu0 0.0
    %905 = vmatprep.subr.mxu0 0.0
    %906 = vmatpush1.msra.mxu0 0.0
    %907 = vmatprep.subr.mxu0 0.0
    %908 = vmatpush1.msra.mxu0 0.0
    %909 = vmatprep.subr.mxu0 0.0
    %910 = vmatpush1.msra.mxu0 0.0
    %911 = vmatprep.subr.mxu0 0.0
    %912 = vmatpush1.msra.mxu0 0.0
    %913 = vmatprep.subr.mxu0 0.0
    %914 = vmatpush1.msra.mxu0 0.0
    %915 = vmatprep.subr.mxu0 0.0
    %916 = vmatpush1.msra.mxu0 0.0
    %917 = vmatprep.subr.mxu0 0.0
    %918 = vmatpush1.msra.mxu0 0.0
    %919 = vmatprep.subr.mxu0 0.0
    %920 = vmatpush1.msra.mxu0 0.0
    %921 = vmatprep.subr.mxu0 0.0
    %922 = vmatpush1.msra.mxu0 0.0
    %923 = vmatprep.subr.mxu0 0.0
    %924 = vmatpush1.msra.mxu0 0.0
    %925 = vmatprep.subr.mxu0 0.0
    %926 = vmatpush1.msra.mxu0 0.0
    %927 = vmatprep.subr.mxu0 0.0
    %928 = vmatpush1.msra.mxu0 0.0
    %929 = vmatprep.subr.mxu0 0.0
    %930 = vmatpush1.msra.mxu0 0.0
    %931 = vmatprep.subr.mxu0 0.0
    %932 = vmatpush1.msra.mxu0 0.0
    %933 = vmatprep.subr.mxu0 0.0
    %934 = vmatpush1.msra.mxu0 0.0
    %935 = vmatprep.subr.mxu0 0.0
    %936 = vmatpush1.msra.mxu0 0.0
    %937 = vmatprep.subr.mxu0 0.0
    %938 = vmatpush1.msra.mxu0 0.0
    %939 = vmatprep.mubr.f32.mxu0 0.0
    %940 = vmatmul.mubr.f32.gmra.mrb[0].mxu0 %v268
    %v941 = vpop.f32.mrb[0].mxu0
    %v942 = vadd.f32 0.0, %v941
    %v943 = vpop.f32.mrb[0].mxu0
    %944 = vdwg.mxu0
    %946 = vrot.lane.b32.xlu0 %v942, 64
    %v947 = vpop.permute.xlu0 %946
    %v949 = vsel %vm344, %v868, %v947
    %950 = vmatprep.subr.mxu0 %v67
    %951 = vmatpush1.msra.mxu0 %v66
    %952 = vmatprep.subr.mxu0 %v69
    %953 = vmatpush1.msra.mxu0 %v68
    %954 = vmatprep.subr.mxu0 %v71
    %955 = vmatpush1.msra.mxu0 %v70
    %956 = vmatprep.subr.mxu0 %v73
    %957 = vmatpush1.msra.mxu0 %v72
    %958 = vmatprep.subr.mxu0 %v75
    %959 = vmatpush1.msra.mxu0 %v74
    %960 = vmatprep.subr.mxu0 %v77
    %961 = vmatpush1.msra.mxu0 %v76
    %962 = vmatprep.subr.mxu0 %v79
    %963 = vmatpush1.msra.mxu0 %v78
    %964 = vmatprep.subr.mxu0 %v81
    %965 = vmatpush1.msra.mxu0 %v80
    %966 = vmatprep.subr.mxu0 %v83
    %967 = vmatpush1.msra.mxu0 %v82
    %968 = vmatprep.subr.mxu0 %v85
    %969 = vmatpush1.msra.mxu0 %v84
    %970 = vmatprep.subr.mxu0 %v87
    %971 = vmatpush1.msra.mxu0 %v86
    %972 = vmatprep.subr.mxu0 %v89
    %973 = vmatpush1.msra.mxu0 %v88
    %974 = vmatprep.subr.mxu0 %v91
    %975 = vmatpush1.msra.mxu0 %v90
    %976 = vmatprep.subr.mxu0 %v93
    %977 = vmatpush1.msra.mxu0 %v92
    %978 = vmatprep.subr.mxu0 %v95
    %979 = vmatpush1.msra.mxu0 %v94
    %980 = vmatprep.subr.mxu0 %v97
    %981 = vmatpush1.msra.mxu0 %v96
    %982 = vmatprep.subr.mxu0 0.0
    %983 = vmatpush1.msra.mxu0 0.0
    %984 = vmatprep.subr.mxu0 0.0
    %985 = vmatpush1.msra.mxu0 0.0
    %986 = vmatprep.subr.mxu0 0.0
    %987 = vmatpush1.msra.mxu0 0.0
    %988 = vmatprep.subr.mxu0 0.0
    %989 = vmatpush1.msra.mxu0 0.0
    %990 = vmatprep.subr.mxu0 0.0
    %991 = vmatpush1.msra.mxu0 0.0
    %992 = vmatprep.subr.mxu0 0.0
    %993 = vmatpush1.msra.mxu0 0.0
    %994 = vmatprep.subr.mxu0 0.0
    %995 = vmatpush1.msra.mxu0 0.0
    %996 = vmatprep.subr.mxu0 0.0
    %997 = vmatpush1.msra.mxu0 0.0
    %998 = vmatprep.subr.mxu0 0.0
    %999 = vmatpush1.msra.mxu0 0.0
    %1000 = vmatprep.subr.mxu0 0.0
    %1001 = vmatpush1.msra.mxu0 0.0
    %1002 = vmatprep.subr.mxu0 0.0
    %1003 = vmatpush1.msra.mxu0 0.0
    %1004 = vmatprep.subr.mxu0 0.0
    %1005 = vmatpush1.msra.mxu0 0.0
    %1006 = vmatprep.subr.mxu0 0.0
    %1007 = vmatpush1.msra.mxu0 0.0
    %1008 = vmatprep.subr.mxu0 0.0
    %1009 = vmatpush1.msra.mxu0 0.0
    %1010 = vmatprep.subr.mxu0 0.0
    %1011 = vmatpush1.msra.mxu0 0.0
    %1012 = vmatprep.subr.mxu0 0.0
    %1013 = vmatpush1.msra.mxu0 0.0
    %1014 = vmatprep.mubr.f32.mxu0 0.0
    %1015 = vmatmul.mubr.f32.gmra.mrb[0].mxu0 %v949
    %v1016 = vpop.f32.mrb[0].mxu0
    %v1017 = vadd.f32 0.0, %v1016
    %v1018 = vpop.f32.mrb[0].mxu0
    %v1019 = vadd.f32 0.0, %v1018
    %1020 = vdwg.mxu0
    %v1021 = vadd.f32 %v189, %v1017
    %v1022 = vadd.f32 %v191, %v1019
    %v1023 = vxor.u32 %v1021, 2147483648
    %v1024 = vxor.u32 %v1022, 2147483648
    %v1025 = vmul.f32 %v1023, 1.442695
    %v1026 = vpow.pop %v1025
    %v1027 = vmul.f32 %v1024, 1.442695
    %v1028 = vpow.pop %v1027
    %v1029 = vadd.f32 %v1026, 1.0
    %v1030 = vadd.f32 %v1028, 1.0
    %v1031 = vrcp.pop %v1029
    %v1032 = vmul.f32 1.0, %v1031
    %v1033 = vrcp.pop %v1030
    %v1034 = vmul.f32 1.0, %v1033
    %v1035 = vtanh.pop %v1022
    %1037 = vrot.lane.b32.xlu0 %v1035, 64
    %v1038 = vpop.permute.xlu0 %1037
    %v1040 = vmul.f32 %v1032, %v1038
    %1042 = vrot.lane.b32.xlu0 %v949, 32
    %v1043 = vpop.permute.xlu0 %1042
    %v1045 = vmul.f32 %v1032, %v1043
    %1047 = vrot.lane.b32.xlu0 %v1045, 64
    %v1048 = vpop.permute.xlu0 %1047
    %v1050 = vadd.f32 %v1040, %v1048
    %v1051 = vmul.f32 %v1032, %v1035
    %1052 = vrot.lane.b32.xlu0 %v949, 64
    %v1053 = vpop.permute.xlu0 %1052
    %v1055 = vmul.f32 %v1034, %v1053
    %1057 = vrot.lane.b32.xlu0 %v1055, 64
    %v1058 = vpop.permute.xlu0 %1057
    %v1060 = vadd.f32 %v1051, %v1058
    %1062 = vrot.lane.b32.xlu0 %v1060, 64
    %v1063 = vpop.permute.xlu0 %1062
    %v1065 = vsel %vm118, %v1050, %v1063
    %v1066 = vtanh.pop %v1065
    %1068 = vrot.lane.b32.xlu0 %v1066, 32
    %v1069 = vpop.permute.xlu0 %1068
    %v1071 = vmul.f32 %v1032, %v1069
    %1072 = vrot.lane.b32.xlu0 %v1066, 96
    %v1073 = vpop.permute.xlu0 %1072
    %v1075 = vmul.f32 %v1034, %v1073
    %vm1076 = vcmp.eq.s32.totalorder %v65, 2
    %1078 = vrot.lane.b32.xlu0 %v1071, 96
    %v1079 = vpop.permute.xlu0 %1078
    %1082 = vrot.lane.b32.xlu0 %v1050, 32
    %v1083 = vpop.permute.xlu0 %1082
    %v1085 = vsel %vm118, %v1079, %v1083
    %v1086 = vsel %vm1076, 1, 0
    %1087 = vset.pattern.permute.xlu0 0
    %1088 = vperm.xlu0 %1087, %v1086
    %v1089 = vpop.permute.xlu0 %1088
    %vm1090 = vcmp.eq.s32.totalorder %v1089, 1
    %v1091 = vsel %vm1090, %v1085, %v800
    %v1092 = vsel %vm118, %v1075, %v1063
    %1093 = vset.pattern.permute.xlu0 1
    %1094 = vperm.xlu0 %1093, %v1086
    %v1095 = vpop.permute.xlu0 %1094
    %vm1096 = vcmp.eq.s32.totalorder %v1095, 1
    %v1097 = vsel %vm1096, %v1092, %v873
    %1099 = vrot.lane.b32.xlu0 %v1097, 64
    %v1100 = vpop.permute.xlu0 %1099
    %v1102 = vsel %vm344, %v1091, %v1100
    %1103 = vmatprep.subr.mxu0 0.0
    %1104 = vmatpush1.msra.mxu0 %v1102
    %1105 = vmatprep.subr.mxu0 0.0
    %1106 = vmatpush1.msra.mxu0 0.0
    %1107 = vmatprep.subr.mxu0 0.0
    %1108 = vmatpush1.msra.mxu0 0.0
    %1109 = vmatprep.subr.mxu0 0.0
    %1110 = vmatpush1.msra.mxu0 0.0
    %1111 = vmatprep.subr.mxu0 0.0
    %1112 = vmatpush1.msra.mxu0 0.0
    %1113 = vmatprep.subr.mxu0 0.0
    %1114 = vmatpush1.msra.mxu0 0.0
    %1115 = vmatprep.subr.mxu0 0.0
    %1116 = vmatpush1.msra.mxu0 0.0
    %1117 = vmatprep.subr.mxu0 0.0
    %1118 = vmatpush1.msra.mxu0 0.0
    %1119 = vmatprep.subr.mxu0 0.0
    %1120 = vmatpush1.msra.mxu0 0.0
    %1121 = vmatprep.subr.mxu0 0.0
    %1122 = vmatpush1.msra.mxu0 0.0
    %1123 = vmatprep.subr.mxu0 0.0
    %1124 = vmatpush1.msra.mxu0 0.0
    %1125 = vmatprep.subr.mxu0 0.0
    %1126 = vmatpush1.msra.mxu0 0.0
    %1127 = vmatprep.subr.mxu0 0.0
    %1128 = vmatpush1.msra.mxu0 0.0
    %1129 = vmatprep.subr.mxu0 0.0
    %1130 = vmatpush1.msra.mxu0 0.0
    %1131 = vmatprep.subr.mxu0 0.0
    %1132 = vmatpush1.msra.mxu0 0.0
    %1133 = vmatprep.subr.mxu0 0.0
    %1134 = vmatpush1.msra.mxu0 0.0
    %1135 = vmatprep.subr.mxu0 0.0
    %1136 = vmatpush1.msra.mxu0 0.0
    %1137 = vmatprep.subr.mxu0 0.0
    %1138 = vmatpush1.msra.mxu0 0.0
    %1139 = vmatprep.subr.mxu0 0.0
    %1140 = vmatpush1.msra.mxu0 0.0
    %1141 = vmatprep.subr.mxu0 0.0
    %1142 = vmatpush1.msra.mxu0 0.0
    %1143 = vmatprep.subr.mxu0 0.0
    %1144 = vmatpush1.msra.mxu0 0.0
    %1145 = vmatprep.subr.mxu0 0.0
    %1146 = vmatpush1.msra.mxu0 0.0
    %1147 = vmatprep.subr.mxu0 0.0
    %1148 = vmatpush1.msra.mxu0 0.0
    %1149 = vmatprep.subr.mxu0 0.0
    %1150 = vmatpush1.msra.mxu0 0.0
    %1151 = vmatprep.subr.mxu0 0.0
    %1152 = vmatpush1.msra.mxu0 0.0
    %1153 = vmatprep.subr.mxu0 0.0
    %1154 = vmatpush1.msra.mxu0 0.0
    %1155 = vmatprep.subr.mxu0 0.0
    %1156 = vmatpush1.msra.mxu0 0.0
    %1157 = vmatprep.subr.mxu0 0.0
    %1158 = vmatpush1.msra.mxu0 0.0
    %1159 = vmatprep.subr.mxu0 0.0
    %1160 = vmatpush1.msra.mxu0 0.0
    %1161 = vmatprep.subr.mxu0 0.0
    %1162 = vmatpush1.msra.mxu0 0.0
    %1163 = vmatprep.subr.mxu0 0.0
    %1164 = vmatpush1.msra.mxu0 0.0
    %1165 = vmatprep.subr.mxu0 0.0
    %1166 = vmatpush1.msra.mxu0 0.0
    %1167 = vmatprep.mubr.f32.mxu0 0.0
    %1168 = vmatmul.mubr.f32.gmra.mrb[0].mxu0 %v195
    %v1169 = vpop.f32.mrb[0].mxu0
    %v1170 = vadd.f32 0.0, %v1169
    %v1171 = vpop.f32.mrb[0].mxu0
    %1172 = vdwg.mxu0
    %1174 = vrot.lane.b32.xlu0 %v1102, 64
    %v1175 = vpop.permute.xlu0 %1174
    %1177 = vmatprep.subr.mxu0 0.0
    %1178 = vmatpush1.msra.mxu0 %v1175
    %1179 = vmatprep.subr.mxu0 0.0
    %1180 = vmatpush1.msra.mxu0 0.0
    %1181 = vmatprep.subr.mxu0 0.0
    %1182 = vmatpush1.msra.mxu0 0.0
    %1183 = vmatprep.subr.mxu0 0.0
    %1184 = vmatpush1.msra.mxu0 0.0
    %1185 = vmatprep.subr.mxu0 0.0
    %1186 = vmatpush1.msra.mxu0 0.0
    %1187 = vmatprep.subr.mxu0 0.0
    %1188 = vmatpush1.msra.mxu0 0.0
    %1189 = vmatprep.subr.mxu0 0.0
    %1190 = vmatpush1.msra.mxu0 0.0
    %1191 = vmatprep.subr.mxu0 0.0
    %1192 = vmatpush1.msra.mxu0 0.0
    %1193 = vmatprep.subr.mxu0 0.0
    %1194 = vmatpush1.msra.mxu0 0.0
    %1195 = vmatprep.subr.mxu0 0.0
    %1196 = vmatpush1.msra.mxu0 0.0
    %1197 = vmatprep.subr.mxu0 0.0
    %1198 = vmatpush1.msra.mxu0 0.0
    %1199 = vmatprep.subr.mxu0 0.0
    %1200 = vmatpush1.msra.mxu0 0.0
    %1201 = vmatprep.subr.mxu0 0.0
    %1202 = vmatpush1.msra.mxu0 0.0
    %1203 = vmatprep.subr.mxu0 0.0
    %1204 = vmatpush1.msra.mxu0 0.0
    %1205 = vmatprep.subr.mxu0 0.0
    %1206 = vmatpush1.msra.mxu0 0.0
    %1207 = vmatprep.subr.mxu0 0.0
    %1208 = vmatpush1.msra.mxu0 0.0
    %1209 = vmatprep.subr.mxu0 0.0
    %1210 = vmatpush1.msra.mxu0 0.0
    %1211 = vmatprep.subr.mxu0 0.0
    %1212 = vmatpush1.msra.mxu0 0.0
    %1213 = vmatprep.subr.mxu0 0.0
    %1214 = vmatpush1.msra.mxu0 0.0
    %1215 = vmatprep.subr.mxu0 0.0
    %1216 = vmatpush1.msra.mxu0 0.0
    %1217 = vmatprep.subr.mxu0 0.0
    %1218 = vmatpush1.msra.mxu0 0.0
    %1219 = vmatprep.subr.mxu0 0.0
    %1220 = vmatpush1.msra.mxu0 0.0
    %1221 = vmatprep.subr.mxu0 0.0
    %1222 = vmatpush1.msra.mxu0 0.0
    %1223 = vmatprep.subr.mxu0 0.0
    %1224 = vmatpush1.msra.mxu0 0.0
    %1225 = vmatprep.subr.mxu0 0.0
    %1226 = vmatpush1.msra.mxu0 0.0
    %1227 = vmatprep.subr.mxu0 0.0
    %1228 = vmatpush1.msra.mxu0 0.0
    %1229 = vmatprep.subr.mxu0 0.0
    %1230 = vmatpush1.msra.mxu0 0.0
    %1231 = vmatprep.subr.mxu0 0.0
    %1232 = vmatpush1.msra.mxu0 0.0
    %1233 = vmatprep.subr.mxu0 0.0
    %1234 = vmatpush1.msra.mxu0 0.0
    %1235 = vmatprep.subr.mxu0 0.0
    %1236 = vmatpush1.msra.mxu0 0.0
    %1237 = vmatprep.subr.mxu0 0.0
    %1238 = vmatpush1.msra.mxu0 0.0
    %1239 = vmatprep.subr.mxu0 0.0
    %1240 = vmatpush1.msra.mxu0 0.0
    %1241 = vmatprep.mubr.f32.mxu0 0.0
    %1242 = vmatmul.mubr.f32.gmra.mrb[0].mxu0 %v268
    %v1243 = vpop.f32.mrb[0].mxu0
    %v1244 = vadd.f32 0.0, %v1243
    %v1245 = vpop.f32.mrb[0].mxu0
    %1246 = vdwg.mxu0
    %1248 = vrot.lane.b32.xlu0 %v1244, 64
    %v1249 = vpop.permute.xlu0 %1248
    %v1251 = vsel %vm344, %v1170, %v1249
    %1252 = vmatprep.subr.mxu0 %v67
    %1253 = vmatpush1.msra.mxu0 %v66
    %1254 = vmatprep.subr.mxu0 %v69
    %1255 = vmatpush1.msra.mxu0 %v68
    %1256 = vmatprep.subr.mxu0 %v71
    %1257 = vmatpush1.msra.mxu0 %v70
    %1258 = vmatprep.subr.mxu0 %v73
    %1259 = vmatpush1.msra.mxu0 %v72
    %1260 = vmatprep.subr.mxu0 %v75
    %1261 = vmatpush1.msra.mxu0 %v74
    %1262 = vmatprep.subr.mxu0 %v77
    %1263 = vmatpush1.msra.mxu0 %v76
    %1264 = vmatprep.subr.mxu0 %v79
    %1265 = vmatpush1.msra.mxu0 %v78
    %1266 = vmatprep.subr.mxu0 %v81
    %1267 = vmatpush1.msra.mxu0 %v80
    %1268 = vmatprep.subr.mxu0 %v83
    %1269 = vmatpush1.msra.mxu0 %v82
    %1270 = vmatprep.subr.mxu0 %v85
    %1271 = vmatpush1.msra.mxu0 %v84
    %1272 = vmatprep.subr.mxu0 %v87
    %1273 = vmatpush1.msra.mxu0 %v86
    %1274 = vmatprep.subr.mxu0 %v89
    %1275 = vmatpush1.msra.mxu0 %v88
    %1276 = vmatprep.subr.mxu0 %v91
    %1277 = vmatpush1.msra.mxu0 %v90
    %1278 = vmatprep.subr.mxu0 %v93
    %1279 = vmatpush1.msra.mxu0 %v92
    %1280 = vmatprep.subr.mxu0 %v95
    %1281 = vmatpush1.msra.mxu0 %v94
    %1282 = vmatprep.subr.mxu0 %v97
    %1283 = vmatpush1.msra.mxu0 %v96
    %1284 = vmatprep.subr.mxu0 0.0
    %1285 = vmatpush1.msra.mxu0 0.0
    %1286 = vmatprep.subr.mxu0 0.0
    %1287 = vmatpush1.msra.mxu0 0.0
    %1288 = vmatprep.subr.mxu0 0.0
    %1289 = vmatpush1.msra.mxu0 0.0
    %1290 = vmatprep.subr.mxu0 0.0
    %1291 = vmatpush1.msra.mxu0 0.0
    %1292 = vmatprep.subr.mxu0 0.0
    %1293 = vmatpush1.msra.mxu0 0.0
    %1294 = vmatprep.subr.mxu0 0.0
    %1295 = vmatpush1.msra.mxu0 0.0
    %1296 = vmatprep.subr.mxu0 0.0
    %1297 = vmatpush1.msra.mxu0 0.0
    %1298 = vmatprep.subr.mxu0 0.0
    %1299 = vmatpush1.msra.mxu0 0.0
    %1300 = vmatprep.subr.mxu0 0.0
    %1301 = vmatpush1.msra.mxu0 0.0
    %1302 = vmatprep.subr.mxu0 0.0
    %1303 = vmatpush1.msra.mxu0 0.0
    %1304 = vmatprep.subr.mxu0 0.0
    %1305 = vmatpush1.msra.mxu0 0.0
    %1306 = vmatprep.subr.mxu0 0.0
    %1307 = vmatpush1.msra.mxu0 0.0
    %1308 = vmatprep.subr.mxu0 0.0
    %1309 = vmatpush1.msra.mxu0 0.0
    %1310 = vmatprep.subr.mxu0 0.0
    %1311 = vmatpush1.msra.mxu0 0.0
    %1312 = vmatprep.subr.mxu0 0.0
    %1313 = vmatpush1.msra.mxu0 0.0
    %1314 = vmatprep.subr.mxu0 0.0
    %1315 = vmatpush1.msra.mxu0 0.0
    %1316 = vmatprep.mubr.f32.mxu0 0.0
    %1317 = vmatmul.mubr.f32.gmra.mrb[0].mxu0 %v1251
    %v1318 = vpop.f32.mrb[0].mxu0
    %v1319 = vadd.f32 0.0, %v1318
    %v1320 = vpop.f32.mrb[0].mxu0
    %v1321 = vadd.f32 0.0, %v1320
    %1322 = vdwg.mxu0
    %v1323 = vadd.f32 %v189, %v1319
    %v1324 = vadd.f32 %v191, %v1321
    %v1325 = vxor.u32 %v1323, 2147483648
    %v1326 = vxor.u32 %v1324, 2147483648
    %v1327 = vmul.f32 %v1325, 1.442695
    %v1328 = vpow.pop %v1327
    %v1329 = vmul.f32 %v1326, 1.442695
    %v1330 = vpow.pop %v1329
    %v1331 = vadd.f32 %v1328, 1.0
    %v1332 = vadd.f32 %v1330, 1.0
    %v1333 = vrcp.pop %v1331
    %v1334 = vmul.f32 1.0, %v1333
    %v1335 = vrcp.pop %v1332
    %v1336 = vmul.f32 1.0, %v1335
    %v1337 = vtanh.pop %v1324
    %1339 = vrot.lane.b32.xlu0 %v1337, 64
    %v1340 = vpop.permute.xlu0 %1339
    %v1342 = vmul.f32 %v1334, %v1340
    %1344 = vrot.lane.b32.xlu0 %v1251, 32
    %v1345 = vpop.permute.xlu0 %1344
    %v1347 = vmul.f32 %v1334, %v1345
    %1349 = vrot.lane.b32.xlu0 %v1347, 64
    %v1350 = vpop.permute.xlu0 %1349
    %v1352 = vadd.f32 %v1342, %v1350
    %v1353 = vmul.f32 %v1334, %v1337
    %1354 = vrot.lane.b32.xlu0 %v1251, 64
    %v1355 = vpop.permute.xlu0 %1354
    %v1357 = vmul.f32 %v1336, %v1355
    %1359 = vrot.lane.b32.xlu0 %v1357, 64
    %v1360 = vpop.permute.xlu0 %1359
    %v1362 = vadd.f32 %v1353, %v1360
    %1364 = vrot.lane.b32.xlu0 %v1362, 64
    %v1365 = vpop.permute.xlu0 %1364
    %v1367 = vsel %vm118, %v1352, %v1365
    %v1368 = vtanh.pop %v1367
    %1370 = vrot.lane.b32.xlu0 %v1368, 32
    %v1371 = vpop.permute.xlu0 %1370
    %v1373 = vmul.f32 %v1334, %v1371
    %1374 = vrot.lane.b32.xlu0 %v1368, 96
    %v1375 = vpop.permute.xlu0 %1374
    %v1377 = vmul.f32 %v1336, %v1375
    %vm1378 = vcmp.eq.s32.totalorder %v65, 3
    %1380 = vrot.lane.b32.xlu0 %v1373, 96
    %v1381 = vpop.permute.xlu0 %1380
    %1384 = vrot.lane.b32.xlu0 %v1352, 32
    %v1385 = vpop.permute.xlu0 %1384
    %v1387 = vsel %vm118, %v1381, %v1385
    %v1388 = vsel %vm1378, 1, 0
    %1389 = vset.pattern.permute.xlu0 0
    %1390 = vperm.xlu0 %1389, %v1388
    %v1391 = vpop.permute.xlu0 %1390
    %vm1392 = vcmp.eq.s32.totalorder %v1391, 1
    %v1393 = vsel %vm1392, %v1387, %v1102
    %v1394 = vsel %vm118, %v1377, %v1365
    %1395 = vset.pattern.permute.xlu0 1
    %1396 = vperm.xlu0 %1395, %v1388
    %v1397 = vpop.permute.xlu0 %1396
    %vm1398 = vcmp.eq.s32.totalorder %v1397, 1
    %v1399 = vsel %vm1398, %v1394, %v1175
    %1401 = vrot.lane.b32.xlu0 %v1399, 64
    %v1402 = vpop.permute.xlu0 %1401
    %v1404 = vsel %vm344, %v1393, %v1402
    %1405 = vst [vmem:[#allocation2] sm:$0xff] %v1404
    %s1406 = sld [smem:[#allocation4]]
    %s1407 = scalar_lea.vmem [#allocation2], %s1406
    %v1408 = vld [vmem:[%s1407] sm:$0x1]
    %s1409 = sld [smem:[#allocation4 + $0x1]]
    %s1410 = scalar_lea.vmem [#allocation2], %s1409
    %v1411 = vld [vmem:[%s1410] sm:$0x1]
    %s1412 = sld [smem:[#allocation4 + $0x2]]
    %s1413 = scalar_lea.vmem [#allocation2], %s1412
    %v1414 = vld [vmem:[%s1413] sm:$0x1]
    %1416 = vrot.lane.b32.xlu0 %v1414, 64
    %v1417 = vpop.permute.xlu0 %1416
    %1420 = vrot.lane.b32.xlu0 %v1408, 32
    %v1421 = vpop.permute.xlu0 %1420
    %1424 = vrot.lane.b32.xlu0 %v1411, 64
    %v1425 = vpop.permute.xlu0 %1424
    %v1427 = vsel %vm118, %v1417, %v1421
    %v1428 = vsel %vm344, %v1427, %v1425
    %vm1429 = vcmask 785408
    %v1430 = vsel %vm1429, %v1428, 0.0
    %1431 = vrot.lane.b32.xlu0 %v1411, 32
    %v1432 = vpop.permute.xlu0 %1431
    %1434 = vrot.lane.b32.xlu0 %v1408, 64
    %v1435 = vpop.permute.xlu0 %1434
    %v1437 = vsel %vm118, %v1417, %v1432
    %v1438 = vsel %vm344, %v1437, %v1435
    %v1439 = vsel %vm1429, %v1438, 0.0
    %v1441 = vrot.slane %v1439, 7
    %vm1443 = vcmask 1040384
    %v1444 = vsel %vm1443, %v1430, %v1441
    %1445 = vst [vmem:[#allocation10] sm:$0x3] %v1444
    // Predicated region
    $region34: #{tpu_custom_call.1} parent=1 // pred_check
      _
    $region35: #{tpu_custom_call.1} parent=1 // pred_check_branch
      %1447 = sbr.rel (0) target = $region37
    $region36: #{tpu_custom_call.1} parent=1 // pred_region
      %s1449 = ssub.s32 32, 32
      %1450 = vsyncadd [#allocation7], %s1449
      %s1452 = sshll.u32 [#allocation10], 4
      %s1453 = int_to_ptr.vmem [resolvable:$true] %s1452
      %1455 = dma.vmem_to_hbm [thread:$0]  %s1453, 32, %s7, [#allocation7]
    $region37: #{tpu_custom_call.1} parent=1 // pred_fallthru
      _
    // Predicated region
    $region38: #{tpu_custom_call.1} parent=1 // pred_check
      _
    $region39: #{tpu_custom_call.1} parent=1 // pred_check_branch
      %1457 = sbr.rel (0) target = $region41
    $region40: #{tpu_custom_call.1} parent=1 // pred_region
      %1458 = dma.done [#allocation7], 32
    $region41: #{tpu_custom_call.1} parent=1 // pred_fallthru
      _
    %1459 = vsyncpa [#allocation6], 1
    %1460 = vsyncpa [#allocation9], 1
    %1461 = vsyncpa [#allocation7], 1

</llo_original>
